<compile_context>
chip_gen: v6e
topology: v6e:2x2x1
jax: 0.10.0
libtpu: 0.0.40
codegen_flags: <defaults>
</compile_context>

<pallas_src>
import numpy as np
import jax
import jax.numpy as jnp
from jax import lax
from jax.experimental import pallas as pl
from jax.experimental.pallas import tpu as pltpu


def _round_up(x, m):
    return ((x + m - 1) // m) * m


# ------------------------- offline parameter packing -------------------------

def pack_inputs(params, *, batch, in_channels, n_dim_x, n_dim_y, n1d,
                rnn_hidden_dim, n_actions):
    """Pack all weights into 2 bf16 slabs + 1 f32 bias slab (done once)."""
    k = 3
    oh1 = (n_dim_x - k) // 2 + 1
    ow1 = (n_dim_y - k) // 2 + 1
    oh2, ow2 = oh1 - k + 1, ow1 - k + 1
    c1 = c2 = 32
    B, H, A = batch, rnn_hidden_dim, n_actions

    m1 = _round_up(B * oh1, 16)          # padded y1 rows (bf16 sublane tile)
    m2 = _round_up(B * oh2, 16)          # padded y2 rows
    W1 = ow1 * c1                        # conv1 output lane width (224)
    W2 = ow2 * c2                        # conv2 output lane width (160)
    CS = _round_up(max(W1, W2), 128)     # per-kh lane-block stride (128-aligned)
    WIDE = k * CS

    w1 = np.asarray(params['conv1_w'], np.float32)      # HWIO (3,3,Cin,32)
    w2 = np.asarray(params['conv2_w'], np.float32)      # HWIO (3,3,32,32)

    # conv1: width-Toeplitz weights, one 128-aligned lane block per kh.
    t1big = np.zeros((n_dim_y * in_channels, WIDE), np.float32)
    for kh in range(k):
        for kw in range(k):
            for ow in range(ow1):
                iw = 2 * ow + kw
                t1big[iw * in_channels:(iw + 1) * in_channels,
                      kh * CS + ow * c1: kh * CS + (ow + 1) * c1] = w1[kh, kw]

    # conv2 (stride 1)
    t2big = np.zeros((W1, WIDE), np.float32)
    for kh in range(k):
        for kw in range(k):
            for ow in range(ow2):
                iw = ow + kw
                t2big[iw * c1:(iw + 1) * c1,
                      kh * CS + ow * c2: kh * CS + (ow + 1) * c2] = w2[kh, kw]

    # conv second-stage 0/1 row-selection matrices (handle kh offset, stride,
    # per-batch packing and sublane padding).
    s1cat = np.zeros((m1, k * B * n_dim_x), np.float32)
    for kh in range(k):
        for b in range(B):
            for oh in range(oh1):
                s1cat[b * oh1 + oh,
                      kh * B * n_dim_x + b * n_dim_x + 2 * oh + kh] = 1.0

    s2cat = np.zeros((m2, k * m1), np.float32)
    for kh in range(k):
        for b in range(B):
            for oh in range(oh2):
                s2cat[b * oh2 + oh, kh * m1 + b * oh1 + oh + kh] = 1.0

    # fc1 conv part, re-indexed from PyTorch NCHW flatten order; one lane block
    # of width H per output row index oh.
    fc1_w = np.asarray(params['fc1_w'], np.float32)      # (n1d + 32*oh2*ow2, H)
    wf2dbig = np.zeros((W2, oh2 * H), np.float32)
    for oh in range(oh2):
        for ow in range(ow2):
            for co in range(c2):
                wf2dbig[ow * c2 + co, oh * H:(oh + 1) * H] = \
                    fc1_w[n1d + co * oh2 * ow2 + oh * ow2 + ow, :]

    pcat = np.zeros((B, oh2 * m2), np.float32)
    for b in range(B):
        for oh in range(oh2):
            pcat[b, oh * m2 + b * oh2 + oh] = 1.0

    wf1d = fc1_w[:n1d, :]

    # GRU: gate weights packed (H, 3H), PyTorch order [r | z | n].
    w_ih3 = np.asarray(params['w_ih3'], np.float32)
    w_hh3 = np.asarray(params['w_hh3'], np.float32)
    wih = np.concatenate([w_ih3[0], w_ih3[1], w_ih3[2]], axis=1)
    whh = np.concatenate([w_hh3[0], w_hh3[1], w_hh3[2]], axis=1)

    wq = np.asarray(params['fc2_w'], np.float32)

    # ----- consolidated bf16 slabs -----
    wbig = np.zeros((n_dim_y * in_channels + W1, WIDE), np.float32)
    wbig[0:n_dim_y * in_channels, :] = t1big
    wbig[n_dim_y * in_channels:, :] = t2big

    SW = max(oh2 * H, k * B * n_dim_x, k * m1, oh2 * m2, 3 * H, H, A)
    off = {}
    r = 0
    off['wf2d'] = r; r += _round_up(W2, 16)
    off['s1'] = r;   r += _round_up(m1, 16)
    off['s2'] = r;   r += _round_up(m2, 16)
    off['pcat'] = r; r += _round_up(max(B, 1), 16)
    off['wf1d'] = r; r += _round_up(max(n1d, 1), 16)
    off['wih'] = r;  r += _round_up(H, 16)
    off['whh'] = r;  r += _round_up(H, 16)
    off['wq'] = r;   r += _round_up(H, 16)
    wsmall = np.zeros((r, SW), np.float32)
    wsmall[off['wf2d']:off['wf2d'] + W2, 0:oh2 * H] = wf2dbig
    wsmall[off['s1']:off['s1'] + m1, 0:k * B * n_dim_x] = s1cat
    wsmall[off['s2']:off['s2'] + m2, 0:k * m1] = s2cat
    wsmall[off['pcat']:off['pcat'] + B, 0:oh2 * m2] = pcat
    wsmall[off['wf1d']:off['wf1d'] + n1d, 0:H] = wf1d
    wsmall[off['wih']:off['wih'] + H, 0:3 * H] = wih
    wsmall[off['whh']:off['whh'] + H, 0:3 * H] = whh
    wsmall[off['wq']:off['wq'] + H, 0:A] = wq

    # ----- f32 bias slab (one 8-row band per bias vector) -----
    BW = max(W1, W2, 3 * H, H, A)
    brow = dict(b1=0, b2=8, fb1=16, bih=24, bhh=32, bq=40)
    biases = np.zeros((48, BW), np.float32)
    biases[brow['b1'], 0:W1] = np.tile(np.asarray(params['conv1_b'], np.float32), ow1)
    biases[brow['b2'], 0:W2] = np.tile(np.asarray(params['conv2_b'], np.float32), ow2)
    biases[brow['fb1'], 0:H] = np.asarray(params['fc1_b'], np.float32)
    biases[brow['bih'], 0:3 * H] = np.asarray(params['b_ih3'], np.float32).reshape(-1)
    biases[brow['bhh'], 0:3 * H] = np.asarray(params['b_hh3'], np.float32).reshape(-1)
    biases[brow['bq'], 0:A] = np.asarray(params['fc2_b'], np.float32)

    arrays = dict(wbig=jnp.asarray(wbig, jnp.bfloat16),
                  wsmall=jnp.asarray(wsmall, jnp.bfloat16),
                  biases=jnp.asarray(biases, jnp.float32))
    meta = dict(batch=B, in_channels=in_channels, n_dim_x=n_dim_x,
                n_dim_y=n_dim_y, n1d=n1d, rnn_hidden_dim=H, n_actions=A,
                k=k, oh1=oh1, ow1=ow1, oh2=oh2, ow2=ow2, m1=m1, m2=m2,
                W1=W1, W2=W2, CS=CS, small_off=off, bias_row=brow)
    return dict(arrays=arrays, meta=meta)


# ------------------------------ fused kernel ---------------------------------

def make_forward(prep):
    a, m = prep['arrays'], prep['meta']
    B, Cin = m['batch'], m['in_channels']
    Hin, Win = m['n_dim_x'], m['n_dim_y']
    n1d, H, A = m['n1d'], m['rnn_hidden_dim'], m['n_actions']
    k, oh2 = m['k'], m['oh2']
    m1, m2 = m['m1'], m['m2']
    W1, W2, CS = m['W1'], m['W2'], m['CS']
    NT1 = Win * Cin
    off, brow = m['small_off'], m['bias_row']
    bf16, f32 = jnp.bfloat16, jnp.float32

    def kernel(x_ref, x1d_ref, h_ref, wbig_ref, wsmall_ref, bias_ref,
               q_ref, hout_ref):
        def dot(lhs, rhs):
            return jnp.dot(lhs, rhs, preferred_element_type=f32)

        def elu(v):
            # exp(min(v,0)) - 1 (abs err <= ~1e-7 vs expm1); guaranteed EUP path.
            return jnp.where(v > 0.0, v, jnp.exp(jnp.minimum(v, 0.0)) - 1.0)

        # ---- conv1 (3x3, stride 2) + ELU:  2 matmuls ----
        xb = x_ref[...].astype(bf16)                              # (B*Hin, Win*Cin)
        v1 = dot(xb, wbig_ref[0:NT1, :])                          # (B*Hin, 3*CS)
        V1 = jnp.concatenate(
            [v1[:, kh * CS:kh * CS + W1].astype(bf16) for kh in range(k)],
            axis=0)                                               # (3*B*Hin, W1)
        s1 = wsmall_ref[off['s1']:off['s1'] + m1, 0:k * B * Hin]
        y1 = elu(dot(s1, V1) + bias_ref[brow['b1']:brow['b1'] + 1, 0:W1])

        # ---- conv2 (3x3, stride 1) + ELU:  2 matmuls ----
        v2 = dot(y1.astype(bf16), wbig_ref[NT1:NT1 + W1, :])      # (m1, 3*CS)
        V2 = jnp.concatenate(
            [v2[:, kh * CS:kh * CS + W2].astype(bf16) for kh in range(k)],
            axis=0)                                               # (3*m1, W2)
        s2 = wsmall_ref[off['s2']:off['s2'] + m2, 0:k * m1]
        y2 = elu(dot(s2, V2) + bias_ref[brow['b2']:brow['b2'] + 1, 0:W2])

        # ---- fc1 + ReLU:  3 matmuls ----
        g = dot(y2.astype(bf16),
                wsmall_ref[off['wf2d']:off['wf2d'] + W2, 0:oh2 * H])  # (m2, oh2*H)
        V3 = jnp.concatenate(
            [g[:, oh * H:(oh + 1) * H].astype(bf16) for oh in range(oh2)],
            axis=0)                                               # (oh2*m2, H)
        pcat = wsmall_ref[off['pcat']:off['pcat'] + B, 0:oh2 * m2]
        wf1d = wsmall_ref[off['wf1d']:off['wf1d'] + n1d, 0:H]
        z = (dot(pcat, V3) + dot(x1d_ref[...].astype(bf16), wf1d)
             + bias_ref[brow['fb1']:brow['fb1'] + 1, 0:H])
        xg = jnp.maximum(z, 0.0)                                  # (B, H)

        # ---- GRUCell (gates packed [r | z | n]):  2 matmuls ----
        h = h_ref[...]                                            # (B, H) f32
        wih = wsmall_ref[off['wih']:off['wih'] + H, 0:3 * H]
        whh = wsmall_ref[off['whh']:off['whh'] + H, 0:3 * H]
        i_all = dot(xg.astype(bf16), wih) + bias_ref[brow['bih']:brow['bih'] + 1, 0:3 * H]
        h_all = dot(h.astype(bf16), whh) + bias_ref[brow['bhh']:brow['bhh'] + 1, 0:3 * H]
        r = jax.nn.sigmoid(i_all[:, 0:H] + h_all[:, 0:H])
        zg = jax.nn.sigmoid(i_all[:, H:2 * H] + h_all[:, H:2 * H])
        n = jnp.tanh(i_all[:, 2 * H:3 * H] + r * h_all[:, 2 * H:3 * H])
        h_new = (1.0 - zg) * n + zg * h                           # (B, H) f32

        # ---- fc2 head:  1 matmul; h passthrough stays f32 ----
        wq = wsmall_ref[off['wq']:off['wq'] + H, 0:A]
        q_ref[...] = dot(h_new.astype(bf16), wq) + bias_ref[brow['bq']:brow['bq'] + 1, 0:A]
        hout_ref[...] = h_new

    vmem = pl.BlockSpec(memory_space=pltpu.MemorySpace.VMEM)
    call = pl.pallas_call(
        kernel,
        out_shape=(jax.ShapeDtypeStruct((B, A), jnp.float32),
                   jax.ShapeDtypeStruct((B, H), jnp.float32)),
        in_specs=[vmem] * 6,
        out_specs=(vmem, vmem),
    )
    wbig, wsmall, biases = a['wbig'], a['wsmall'], a['biases']

    @jax.jit
    def forward(x2d_nchw, x1d, hidden_state):
        # Only remaining per-call glue: the tiny NCHW -> (b*h, w*c) relayout.
        x_mat = jnp.transpose(x2d_nchw.astype(jnp.float32),
                              (0, 2, 3, 1)).reshape(B * Hin, Win * Cin)
        h = hidden_state.reshape(-1, H).astype(jnp.float32)
        q, h_new = call(x_mat, x1d.astype(jnp.float32), h, wbig, wsmall, biases)
        return q, h_new

    return forward


# ----------------------------- pure-JAX reference ----------------------------

def reference_forward(x2d_nchw, x1d, hidden_state, params):
    x = jnp.transpose(x2d_nchw, (0, 2, 3, 1)).astype(jnp.float32)
    dn = ('NHWC', 'HWIO', 'NHWC')
    y1 = lax.conv_general_dilated(x, params['conv1_w'], (2, 2), 'VALID',
                                  dimension_numbers=dn,
                                  precision=lax.Precision.HIGHEST)
    y1 = jax.nn.elu(y1 + params['conv1_b'])
    y2 = lax.conv_general_dilated(y1, params['conv2_w'], (1, 1), 'VALID',
                                  dimension_numbers=dn,
                                  precision=lax.Precision.HIGHEST)
    y2 = jax.nn.elu(y2 + params['conv2_b'])
    B = x.shape[0]
    y2_flat = jnp.transpose(y2, (0, 3, 1, 2)).reshape(B, -1)
    z = jnp.concatenate([x1d.astype(jnp.float32), y2_flat], axis=1)
    hi = lax.Precision.HIGHEST
    xf = jax.nn.relu(jnp.dot(z, params['fc1_w'], precision=hi) + params['fc1_b'])
    H = params['fc1_w'].shape[1]
    h = hidden_state.reshape(-1, H).astype(jnp.float32)

    def g(inp, w3, b3, i):
        return jnp.dot(inp, w3[i], precision=hi) + b3[i]

    r = jax.nn.sigmoid(g(xf, params['w_ih3'], params['b_ih3'], 0)
                       + g(h, params['w_hh3'], params['b_hh3'], 0))
    zg = jax.nn.sigmoid(g(xf, params['w_ih3'], params['b_ih3'], 1)
                        + g(h, params['w_hh3'], params['b_hh3'], 1))
    n = jnp.tanh(g(xf, params['w_ih3'], params['b_ih3'], 2)
                 + r * g(h, params['w_hh3'], params['b_hh3'], 2))
    h_new = (1.0 - zg) * n + zg * h
    q = jnp.dot(h_new, params['fc2_w'], precision=hi) + params['fc2_b']
    return q, h_new


# --------------------------------- parameters --------------------------------

def make_params(key, in_channels, n1d, rnn_hidden_dim, n_actions, conv_out_hw):
    ks = jax.random.split(key, 12)
    ortho = jax.nn.initializers.orthogonal()

    c1 = ortho(ks[0], (32, in_channels * 3 * 3), jnp.float32)
    conv1_w = jnp.transpose(c1.reshape(32, in_channels, 3, 3), (2, 3, 1, 0))  # HWIO
    c2 = ortho(ks[1], (32, 32 * 3 * 3), jnp.float32)
    conv2_w = jnp.transpose(c2.reshape(32, 32, 3, 3), (2, 3, 1, 0))           # HWIO

    f_in = n1d + 32 * conv_out_hw[0] * conv_out_hw[1]
    H, A = rnn_hidden_dim, n_actions

    def lin(kw, kb, fan_in, fan_out):
        s = 1.0 / np.sqrt(fan_in)
        w = jax.random.uniform(kw, (fan_in, fan_out), jnp.float32, -s, s)
        b = jax.random.uniform(kb, (fan_out,), jnp.float32, -s, s)
        return w, b

    fc1_w, fc1_b = lin(ks[2], ks[3], f_in, H)
    fc2_w, fc2_b = lin(ks[4], ks[5], H, A)

    s = 1.0 / np.sqrt(H)
    w_ih3 = jax.random.uniform(ks[6], (3, H, H), jnp.float32, -s, s)
    b_ih3 = jax.random.uniform(ks[7], (3, H), jnp.float32, -s, s)
    w_hh3 = jax.random.uniform(ks[8], (3, H, H), jnp.float32, -s, s)
    b_hh3 = jax.random.uniform(ks[9], (3, H), jnp.float32, -s, s)

    return dict(conv1_w=conv1_w, conv1_b=jnp.zeros((32,), jnp.float32),
                conv2_w=conv2_w, conv2_b=jnp.zeros((32,), jnp.float32),
                fc1_w=fc1_w, fc1_b=fc1_b,
                w_ih3=w_ih3, b_ih3=b_ih3, w_hh3=w_hh3, b_hh3=b_hh3,
                fc2_w=fc2_w, fc2_b=fc2_b)


# ------------------------------------ main ------------------------------------

if __name__ == "__main__":
    B = 2
    in_channels, n_dim_x, n_dim_y = 4, 16, 16        # input_shape['2d']
    n1d = 8                                          # input_shape['1d'][0]
    rnn_hidden_dim = 32
    n_actions = 6

    oh1 = (n_dim_x - 3) // 2 + 1
    ow1 = (n_dim_y - 3) // 2 + 1
    conv_out_hw = (oh1 - 2, ow1 - 2)                 # (5, 5)

    key = jax.random.PRNGKey(0)
    k_p, k_x2, k_x1, k_h = jax.random.split(key, 4)
    params = make_params(k_p, in_channels, n1d, rnn_hidden_dim, n_actions,
                         conv_out_hw)

    x2d = jax.random.normal(k_x2, (B, in_channels, n_dim_x, n_dim_y), jnp.float32)
    x1d = jax.random.normal(k_x1, (B, n1d), jnp.float32)
    hidden = 0.1 * jax.random.normal(k_h, (B, rnn_hidden_dim), jnp.float32)

    prep = pack_inputs(params, batch=B, in_channels=in_channels,
                       n_dim_x=n_dim_x, n_dim_y=n_dim_y, n1d=n1d,
                       rnn_hidden_dim=rnn_hidden_dim, n_actions=n_actions)
    forward = make_forward(prep)

    q, h = forward(x2d, x1d, hidden)
    q = jax.block_until_ready(q)
    h = jax.block_until_ready(h)

    q_ref, h_ref = reference_forward(x2d, x1d, hidden, params)
    # Tolerance absorbs bf16 MXU operands (reference is f32 HIGHEST).
    np.testing.assert_allclose(np.asarray(q), np.asarray(q_ref),
                               rtol=2e-2, atol=2e-2)
    np.testing.assert_allclose(np.asarray(h), np.asarray(h_ref),
                               rtol=2e-2, atol=2e-2)

    assert q.shape == (B, n_actions) and h.shape == (B, rnn_hidden_dim)
    print("KERNEL_OK")
</pallas_src>

<mosaic_0001>
module attributes {stable_mosaic.version = 11 : i64} {
  func.func @kernel(%arg0: memref<32x64xf32, #tpu.memory_space<vmem>>, %arg1: memref<2x8xf32, #tpu.memory_space<vmem>>, %arg2: memref<2x32xf32, #tpu.memory_space<vmem>>, %arg3: memref<288x768xbf16, #tpu.memory_space<vmem>>, %arg4: memref<320x160xbf16, #tpu.memory_space<vmem>>, %arg5: memref<48x224xf32, #tpu.memory_space<vmem>>, %arg6: memref<2x6xf32, #tpu.memory_space<vmem>>, %arg7: memref<2x32xf32, #tpu.memory_space<vmem>>) attributes {dimension_semantics = [], scalar_prefetch = 0 : i64, scratch_operands = 0 : i64, tpu.core_type = #tpu.core_type<tc>} {
    %c0 = arith.constant 0 : index
    %c0_0 = arith.constant 0 : index
    %0 = vector.load %arg0[%c0, %c0_0] : memref<32x64xf32, #tpu.memory_space<vmem>>, vector<32x64xf32>
    %1 = arith.truncf %0 : vector<32x64xf32> to vector<32x64xbf16>
    %c0_1 = arith.constant 0 : index
    %c0_2 = arith.constant 0 : index
    %2 = vector.load %arg3[%c0_1, %c0_2] : memref<288x768xbf16, #tpu.memory_space<vmem>>, vector<64x768xbf16>
    %cst = arith.constant dense<0.000000e+00> : vector<32x768xf32>
    %3 = tpu.matmul %1, %2, %cst {dimension_numbers = #tpu.dot_dimension_numbers<[1], [0], [0], [1], [0, 0, 1, 1], [], []>} : vector<32x64xbf16>, vector<64x768xbf16>, vector<32x768xf32> -> vector<32x768xf32>
    %4 = vector.extract_strided_slice %3 {offsets = [0, 0], sizes = [32, 224], strides = [1, 1]} : vector<32x768xf32> to vector<32x224xf32>
    %5 = arith.truncf %4 : vector<32x224xf32> to vector<32x224xbf16>
    %6 = vector.extract_strided_slice %3 {offsets = [0, 256], sizes = [32, 224], strides = [1, 1]} : vector<32x768xf32> to vector<32x224xf32>
    %7 = arith.truncf %6 : vector<32x224xf32> to vector<32x224xbf16>
    %8 = vector.extract_strided_slice %3 {offsets = [0, 512], sizes = [32, 224], strides = [1, 1]} : vector<32x768xf32> to vector<32x224xf32>
    %9 = arith.truncf %8 : vector<32x224xf32> to vector<32x224xbf16>
    %10 = tpu.concatenate %5, %7, %9 in 0 : vector<32x224xbf16>, vector<32x224xbf16>, vector<32x224xbf16> -> vector<96x224xbf16>
    %c160 = arith.constant 160 : index
    %c0_3 = arith.constant 0 : index
    %11 = vector.load %arg4[%c160, %c0_3] : memref<320x160xbf16, #tpu.memory_space<vmem>>, vector<16x96xbf16>
    %cst_4 = arith.constant dense<0.000000e+00> : vector<16x224xf32>
    %12 = tpu.matmul %11, %10, %cst_4 {dimension_numbers = #tpu.dot_dimension_numbers<[1], [0], [0], [1], [0, 0, 1, 1], [], []>} : vector<16x96xbf16>, vector<96x224xbf16>, vector<16x224xf32> -> vector<16x224xf32>
    %c0_5 = arith.constant 0 : index
    %c0_6 = arith.constant 0 : index
    %13 = vector.load %arg5[%c0_5, %c0_6] : memref<48x224xf32, #tpu.memory_space<vmem>>, vector<1x224xf32>
    %14 = vector.broadcast %13 : vector<1x224xf32> to vector<16x224xf32>
    %15 = arith.addf %12, %14 : vector<16x224xf32>
    %cst_7 = arith.constant 0.000000e+00 : f32
    %16 = vector.broadcast %cst_7 : f32 to vector<16x224xf32>
    %17 = arith.cmpf ogt, %15, %16 : vector<16x224xf32>
    %cst_8 = arith.constant 0.000000e+00 : f32
    %18 = vector.broadcast %cst_8 : f32 to vector<16x224xf32>
    %19 = arith.minimumf %15, %18 : vector<16x224xf32>
    %20 = math.exp %19 : vector<16x224xf32>
    %cst_9 = arith.constant 1.000000e+00 : f32
    %21 = vector.broadcast %cst_9 : f32 to vector<16x224xf32>
    %22 = arith.subf %20, %21 : vector<16x224xf32>
    %23 = arith.select %17, %15, %22 : vector<16x224xi1>, vector<16x224xf32>
    %24 = arith.truncf %23 : vector<16x224xf32> to vector<16x224xbf16>
    %c64 = arith.constant 64 : index
    %c0_10 = arith.constant 0 : index
    %25 = vector.load %arg3[%c64, %c0_10] : memref<288x768xbf16, #tpu.memory_space<vmem>>, vector<224x768xbf16>
    %cst_11 = arith.constant dense<0.000000e+00> : vector<16x768xf32>
    %26 = tpu.matmul %24, %25, %cst_11 {dimension_numbers = #tpu.dot_dimension_numbers<[1], [0], [0], [1], [0, 0, 1, 1], [], []>} : vector<16x224xbf16>, vector<224x768xbf16>, vector<16x768xf32> -> vector<16x768xf32>
    %27 = vector.extract_strided_slice %26 {offsets = [0, 0], sizes = [16, 160], strides = [1, 1]} : vector<16x768xf32> to vector<16x160xf32>
    %28 = arith.truncf %27 : vector<16x160xf32> to vector<16x160xbf16>
    %29 = vector.extract_strided_slice %26 {offsets = [0, 256], sizes = [16, 160], strides = [1, 1]} : vector<16x768xf32> to vector<16x160xf32>
    %30 = arith.truncf %29 : vector<16x160xf32> to vector<16x160xbf16>
    %31 = vector.extract_strided_slice %26 {offsets = [0, 512], sizes = [16, 160], strides = [1, 1]} : vector<16x768xf32> to vector<16x160xf32>
    %32 = arith.truncf %31 : vector<16x160xf32> to vector<16x160xbf16>
    %33 = tpu.concatenate %28, %30, %32 in 0 : vector<16x160xbf16>, vector<16x160xbf16>, vector<16x160xbf16> -> vector<48x160xbf16>
    %c176 = arith.constant 176 : index
    %c0_12 = arith.constant 0 : index
    %34 = vector.load %arg4[%c176, %c0_12] : memref<320x160xbf16, #tpu.memory_space<vmem>>, vector<16x48xbf16>
    %cst_13 = arith.constant dense<0.000000e+00> : vector<16x160xf32>
    %35 = tpu.matmul %34, %33, %cst_13 {dimension_numbers = #tpu.dot_dimension_numbers<[1], [0], [0], [1], [0, 0, 1, 1], [], []>} : vector<16x48xbf16>, vector<48x160xbf16>, vector<16x160xf32> -> vector<16x160xf32>
    %c8 = arith.constant 8 : index
    %c0_14 = arith.constant 0 : index
    %36 = vector.load %arg5[%c8, %c0_14] : memref<48x224xf32, #tpu.memory_space<vmem>>, vector<1x160xf32>
    %37 = vector.broadcast %36 : vector<1x160xf32> to vector<16x160xf32>
    %38 = arith.addf %35, %37 : vector<16x160xf32>
    %cst_15 = arith.constant 0.000000e+00 : f32
    %39 = vector.broadcast %cst_15 : f32 to vector<16x160xf32>
    %40 = arith.cmpf ogt, %38, %39 : vector<16x160xf32>
    %cst_16 = arith.constant 0.000000e+00 : f32
    %41 = vector.broadcast %cst_16 : f32 to vector<16x160xf32>
    %42 = arith.minimumf %38, %41 : vector<16x160xf32>
    %43 = math.exp %42 : vector<16x160xf32>
    %cst_17 = arith.constant 1.000000e+00 : f32
    %44 = vector.broadcast %cst_17 : f32 to vector<16x160xf32>
    %45 = arith.subf %43, %44 : vector<16x160xf32>
    %46 = arith.select %40, %38, %45 : vector<16x160xi1>, vector<16x160xf32>
    %47 = arith.truncf %46 : vector<16x160xf32> to vector<16x160xbf16>
    %c0_18 = arith.constant 0 : index
    %c0_19 = arith.constant 0 : index
    %48 = vector.load %arg4[%c0_18, %c0_19] : memref<320x160xbf16, #tpu.memory_space<vmem>>, vector<160x160xbf16>
    %cst_20 = arith.constant dense<0.000000e+00> : vector<16x160xf32>
    %49 = tpu.matmul %47, %48, %cst_20 {dimension_numbers = #tpu.dot_dimension_numbers<[1], [0], [0], [1], [0, 0, 1, 1], [], []>} : vector<16x160xbf16>, vector<160x160xbf16>, vector<16x160xf32> -> vector<16x160xf32>
    %50 = vector.extract_strided_slice %49 {offsets = [0, 0], sizes = [16, 32], strides = [1, 1]} : vector<16x160xf32> to vector<16x32xf32>
    %51 = arith.truncf %50 : vector<16x32xf32> to vector<16x32xbf16>
    %52 = vector.extract_strided_slice %49 {offsets = [0, 32], sizes = [16, 32], strides = [1, 1]} : vector<16x160xf32> to vector<16x32xf32>
    %53 = arith.truncf %52 : vector<16x32xf32> to vector<16x32xbf16>
    %54 = vector.extract_strided_slice %49 {offsets = [0, 64], sizes = [16, 32], strides = [1, 1]} : vector<16x160xf32> to vector<16x32xf32>
    %55 = arith.truncf %54 : vector<16x32xf32> to vector<16x32xbf16>
    %56 = vector.extract_strided_slice %49 {offsets = [0, 96], sizes = [16, 32], strides = [1, 1]} : vector<16x160xf32> to vector<16x32xf32>
    %57 = arith.truncf %56 : vector<16x32xf32> to vector<16x32xbf16>
    %58 = vector.extract_strided_slice %49 {offsets = [0, 128], sizes = [16, 32], strides = [1, 1]} : vector<16x160xf32> to vector<16x32xf32>
    %59 = arith.truncf %58 : vector<16x32xf32> to vector<16x32xbf16>
    %60 = tpu.concatenate %51, %53, %55, %57, %59 in 0 : vector<16x32xbf16>, vector<16x32xbf16>, vector<16x32xbf16>, vector<16x32xbf16>, vector<16x32xbf16> -> vector<80x32xbf16>
    %c192 = arith.constant 192 : index
    %c0_21 = arith.constant 0 : index
    %61 = vector.load %arg4[%c192, %c0_21] : memref<320x160xbf16, #tpu.memory_space<vmem>>, vector<2x80xbf16>
    %c208 = arith.constant 208 : index
    %c0_22 = arith.constant 0 : index
    %62 = vector.load %arg4[%c208, %c0_22] : memref<320x160xbf16, #tpu.memory_space<vmem>>, vector<8x32xbf16>
    %cst_23 = arith.constant dense<0.000000e+00> : vector<2x32xf32>
    %63 = tpu.matmul %61, %60, %cst_23 {dimension_numbers = #tpu.dot_dimension_numbers<[1], [0], [0], [1], [0, 0, 1, 1], [], []>} : vector<2x80xbf16>, vector<80x32xbf16>, vector<2x32xf32> -> vector<2x32xf32>
    %c0_24 = arith.constant 0 : index
    %c0_25 = arith.constant 0 : index
    %64 = vector.load %arg1[%c0_24, %c0_25] : memref<2x8xf32, #tpu.memory_space<vmem>>, vector<2x8xf32>
    %65 = arith.truncf %64 : vector<2x8xf32> to vector<2x8xbf16>
    %cst_26 = arith.constant dense<0.000000e+00> : vector<2x32xf32>
    %66 = tpu.matmul %65, %62, %cst_26 {dimension_numbers = #tpu.dot_dimension_numbers<[1], [0], [0], [1], [0, 0, 1, 1], [], []>} : vector<2x8xbf16>, vector<8x32xbf16>, vector<2x32xf32> -> vector<2x32xf32>
    %67 = arith.addf %63, %66 : vector<2x32xf32>
    %c16 = arith.constant 16 : index
    %c0_27 = arith.constant 0 : index
    %68 = vector.load %arg5[%c16, %c0_27] : memref<48x224xf32, #tpu.memory_space<vmem>>, vector<1x32xf32>
    %69 = vector.broadcast %68 : vector<1x32xf32> to vector<2x32xf32>
    %70 = arith.addf %67, %69 : vector<2x32xf32>
    %cst_28 = arith.constant 0.000000e+00 : f32
    %71 = vector.broadcast %cst_28 : f32 to vector<2x32xf32>
    %72 = arith.maximumf %70, %71 : vector<2x32xf32>
    %c0_29 = arith.constant 0 : index
    %c0_30 = arith.constant 0 : index
    %73 = vector.load %arg2[%c0_29, %c0_30] : memref<2x32xf32, #tpu.memory_space<vmem>>, vector<2x32xf32>
    %c224 = arith.constant 224 : index
    %c0_31 = arith.constant 0 : index
    %74 = vector.load %arg4[%c224, %c0_31] : memref<320x160xbf16, #tpu.memory_space<vmem>>, vector<32x96xbf16>
    %c256 = arith.constant 256 : index
    %c0_32 = arith.constant 0 : index
    %75 = vector.load %arg4[%c256, %c0_32] : memref<320x160xbf16, #tpu.memory_space<vmem>>, vector<32x96xbf16>
    %76 = arith.truncf %72 : vector<2x32xf32> to vector<2x32xbf16>
    %cst_33 = arith.constant dense<0.000000e+00> : vector<2x96xf32>
    %77 = tpu.matmul %76, %74, %cst_33 {dimension_numbers = #tpu.dot_dimension_numbers<[1], [0], [0], [1], [0, 0, 1, 1], [], []>} : vector<2x32xbf16>, vector<32x96xbf16>, vector<2x96xf32> -> vector<2x96xf32>
    %c24 = arith.constant 24 : index
    %c0_34 = arith.constant 0 : index
    %78 = vector.load %arg5[%c24, %c0_34] : memref<48x224xf32, #tpu.memory_space<vmem>>, vector<1x96xf32>
    %79 = vector.broadcast %78 : vector<1x96xf32> to vector<2x96xf32>
    %80 = arith.addf %77, %79 : vector<2x96xf32>
    %81 = arith.truncf %73 : vector<2x32xf32> to vector<2x32xbf16>
    %cst_35 = arith.constant dense<0.000000e+00> : vector<2x96xf32>
    %82 = tpu.matmul %81, %75, %cst_35 {dimension_numbers = #tpu.dot_dimension_numbers<[1], [0], [0], [1], [0, 0, 1, 1], [], []>} : vector<2x32xbf16>, vector<32x96xbf16>, vector<2x96xf32> -> vector<2x96xf32>
    %c32 = arith.constant 32 : index
    %c0_36 = arith.constant 0 : index
    %83 = vector.load %arg5[%c32, %c0_36] : memref<48x224xf32, #tpu.memory_space<vmem>>, vector<1x96xf32>
    %84 = vector.broadcast %83 : vector<1x96xf32> to vector<2x96xf32>
    %85 = arith.addf %82, %84 : vector<2x96xf32>
    %86 = vector.extract_strided_slice %80 {offsets = [0, 0], sizes = [2, 32], strides = [1, 1]} : vector<2x96xf32> to vector<2x32xf32>
    %87 = vector.extract_strided_slice %85 {offsets = [0, 0], sizes = [2, 32], strides = [1, 1]} : vector<2x96xf32> to vector<2x32xf32>
    %88 = arith.addf %86, %87 : vector<2x32xf32>
    %89 = arith.negf %88 : vector<2x32xf32>
    %90 = math.exp %89 : vector<2x32xf32>
    %cst_37 = arith.constant 1.000000e+00 : f32
    %91 = vector.broadcast %cst_37 : f32 to vector<2x32xf32>
    %92 = arith.addf %91, %90 : vector<2x32xf32>
    %93 = arith.divf %91, %92 : vector<2x32xf32>
    %94 = vector.extract_strided_slice %80 {offsets = [0, 32], sizes = [2, 32], strides = [1, 1]} : vector<2x96xf32> to vector<2x32xf32>
    %95 = vector.extract_strided_slice %85 {offsets = [0, 32], sizes = [2, 32], strides = [1, 1]} : vector<2x96xf32> to vector<2x32xf32>
    %96 = arith.addf %94, %95 : vector<2x32xf32>
    %97 = arith.negf %96 : vector<2x32xf32>
    %98 = math.exp %97 : vector<2x32xf32>
    %cst_38 = arith.constant 1.000000e+00 : f32
    %99 = vector.broadcast %cst_38 : f32 to vector<2x32xf32>
    %100 = arith.addf %99, %98 : vector<2x32xf32>
    %101 = arith.divf %99, %100 : vector<2x32xf32>
    %102 = vector.extract_strided_slice %80 {offsets = [0, 64], sizes = [2, 32], strides = [1, 1]} : vector<2x96xf32> to vector<2x32xf32>
    %103 = vector.extract_strided_slice %85 {offsets = [0, 64], sizes = [2, 32], strides = [1, 1]} : vector<2x96xf32> to vector<2x32xf32>
    %104 = arith.mulf %93, %103 : vector<2x32xf32>
    %105 = arith.addf %102, %104 : vector<2x32xf32>
    %106 = math.tanh %105 : vector<2x32xf32>
    %cst_39 = arith.constant 1.000000e+00 : f32
    %107 = vector.broadcast %cst_39 : f32 to vector<2x32xf32>
    %108 = arith.subf %107, %101 : vector<2x32xf32>
    %109 = arith.mulf %108, %106 : vector<2x32xf32>
    %110 = arith.mulf %101, %73 : vector<2x32xf32>
    %111 = arith.addf %109, %110 : vector<2x32xf32>
    %c288 = arith.constant 288 : index
    %c0_40 = arith.constant 0 : index
    %112 = vector.load %arg4[%c288, %c0_40] : memref<320x160xbf16, #tpu.memory_space<vmem>>, vector<32x6xbf16>
    %113 = arith.truncf %111 : vector<2x32xf32> to vector<2x32xbf16>
    %cst_41 = arith.constant dense<0.000000e+00> : vector<2x6xf32>
    %114 = tpu.matmul %113, %112, %cst_41 {dimension_numbers = #tpu.dot_dimension_numbers<[1], [0], [0], [1], [0, 0, 1, 1], [], []>} : vector<2x32xbf16>, vector<32x6xbf16>, vector<2x6xf32> -> vector<2x6xf32>
    %c40 = arith.constant 40 : index
    %c0_42 = arith.constant 0 : index
    %115 = vector.load %arg5[%c40, %c0_42] : memref<48x224xf32, #tpu.memory_space<vmem>>, vector<1x6xf32>
    %116 = vector.broadcast %115 : vector<1x6xf32> to vector<2x6xf32>
    %117 = arith.addf %114, %116 : vector<2x6xf32>
    %c0_43 = arith.constant 0 : index
    %c0_44 = arith.constant 0 : index
    %118 = vector.load %arg6[%c0_43, %c0_44] : memref<2x6xf32, #tpu.memory_space<vmem>>, vector<2x6xf32>
    tpu.vector_store %arg6[%c0_43, %c0_44], %117 {strides = array<i32>} : memref<2x6xf32, #tpu.memory_space<vmem>>, vector<2x6xf32>,
    %c0_45 = arith.constant 0 : index
    %c0_46 = arith.constant 0 : index
    %119 = vector.load %arg7[%c0_45, %c0_46] : memref<2x32xf32, #tpu.memory_space<vmem>>, vector<2x32xf32>
    tpu.vector_store %arg7[%c0_45, %c0_46], %111 {strides = array<i32>} : memref<2x32xf32, #tpu.memory_space<vmem>>, vector<2x32xf32>,
    return
  }
}

</mosaic_0001>

<llo_original>
// kernel: forward.1
$region0: #{forward.1}
  #allocation0 [shape = 'u32[]', space=smem, size = 0x4, offset = 0x4, fixed_abs, tag = 'smem constant byte address 0x4 - core index']
  #allocation1 [shape = 'u32[144,128]{1,0:T(1,128)}', space=vmem, size = 0x12000, scoped, tag = 'internal scratch']
  %s0 = inlined_call_operand.vmem [shape: f32[32,64], index: 0, kind: input, shape index: {}]
  %s1 = inlined_call_operand.vmem [shape: f32[2,8], index: 1, kind: input, shape index: {}]
  %s2 = inlined_call_operand.vmem [shape: f32[2,32], index: 2, kind: input, shape index: {}]
  %s3 = inlined_call_operand.hbm [shape: bf16[288,768], index: 3, kind: input, shape index: {}]
  %s4 = inlined_call_operand.vmem [shape: bf16[320,160], index: 4, kind: input, shape index: {}]
  %s5 = inlined_call_operand.vmem [shape: f32[48,224], index: 5, kind: input, shape index: {}]
  %s6 = inlined_call_operand.hbm [shape: f32[2,6], index: 6, kind: output, shape index: {0}]
  %s7 = inlined_call_operand.hbm [shape: f32[2,32], index: 7, kind: output, shape index: {1}]
  %8 = xla_tuple %s6, %s7
  %s9 = sld [smem:[#allocation0]]
  $region46: #{forward.1} parent=0
    _
  %s11 = ssub.s32 1, %s9
  %s12 = scalar_select 0, %s11, %s9
  $region1: #{forward.1} parent=0
    #allocation2 [shape = 'u8[442368]{0}', space=vmem, size = 0x6c000, scoped, tag = 'input window, operand 3, single buffered']
    #allocation3 [shape = 's32[1]{0}', space=sflag, size = 0x4, scoped, tag = 'scoped memory for forward.1']
    #allocation4 [shape = 's32[1]{0}', space=sflag, size = 0x4, scoped, tag = 'scoped memory for forward.1']
    #allocation5 [shape = 'u8[1024]{0}', space=vmem, size = 0x400, scoped, tag = 'output window, operand 0, single buffered']
    #allocation6 [shape = 'u8[1024]{0}', space=vmem, size = 0x400, scoped, tag = 'output window, operand 1, single buffered']
    #allocation7 [shape = 's32[1]{0}', space=sflag, size = 0x4, scoped, tag = 'scoped memory for forward.1']
    %13 = vsyncpa [#allocation3], 0
    %14 = vsyncpa [#allocation4], 0
    %15 = vsyncpa [#allocation7], 0
    // Predicated region
    $region2: #{forward.1} parent=1 // pred_check
      _
    $region3: #{forward.1} parent=1 // pred_check_branch
      %17 = sbr.rel (0) target = $region5
    $region4: #{forward.1} parent=1 // pred_region
      _
    $region5: #{forward.1} parent=1 // pred_fallthru
      _
    // Predicated region
    $region6: #{forward.1} parent=1 // pred_check
      _
    $region7: #{forward.1} parent=1 // pred_check_branch
      %19 = sbr.rel (0) target = $region9
    $region8: #{forward.1} parent=1 // pred_region
      _
    $region9: #{forward.1} parent=1 // pred_fallthru
      _
    // Predicated region
    $region10: #{forward.1} parent=1 // pred_check
      _
    $region11: #{forward.1} parent=1 // pred_check_branch
      %21 = sbr.rel (0) target = $region13
    $region12: #{forward.1} parent=1 // pred_region
      _
    $region13: #{forward.1} parent=1 // pred_fallthru
      _
    // Predicated region
    $region14: #{forward.1} parent=1 // pred_check
      _
    $region15: #{forward.1} parent=1 // pred_check_branch
      %23 = sbr.rel (0) target = $region17
    $region16: #{forward.1} parent=1 // pred_region
      %s25 = ssub.s32 13824, 13824
      %26 = vsyncadd [#allocation3], %s25
      %s27 = sshll.u32 [#allocation2], 4
      %s28 = int_to_ptr.vmem [resolvable:$true] %s27
      %33 = dma.hbm_to_vmem [thread:$0]  %s3, 13824, %s28, [#allocation3], 384, 384, 24
    $region17: #{forward.1} parent=1 // pred_fallthru
      _
    // Predicated region
    $region18: #{forward.1} parent=1 // pred_check
      _
    $region19: #{forward.1} parent=1 // pred_check_branch
      %35 = sbr.rel (0) target = $region21
    $region20: #{forward.1} parent=1 // pred_region
      _
    $region21: #{forward.1} parent=1 // pred_fallthru
      _
    // Predicated region
    $region22: #{forward.1} parent=1 // pred_check
      _
    $region23: #{forward.1} parent=1 // pred_check_branch
      %37 = sbr.rel (0) target = $region25
    $region24: #{forward.1} parent=1 // pred_region
      _
    $region25: #{forward.1} parent=1 // pred_fallthru
      _
    // Predicated region
    $region26: #{forward.1} parent=1 // pred_check
      _
    $region27: #{forward.1} parent=1 // pred_check_branch
      %39 = sbr.rel (0) target = $region29
    $region28: #{forward.1} parent=1 // pred_region
      %40 = dma.done [#allocation3], 13824
    $region29: #{forward.1} parent=1 // pred_fallthru
      _
    %v42 = vld [vmem:[%s0] sm:$0xff]
    %v43 = vld [vmem:[%s0 + $0x8] sm:$0xff]
    %v44 = vld [vmem:[%s0 + $0x10] sm:$0xff]
    %v45 = vld [vmem:[%s0 + $0x18] sm:$0xff]
    %v46 = vpack.c.bf16 %v43, %v42
    %v47 = vpack.c.bf16 %v45, %v44
    %v48 = vld [vmem:[#allocation2] sm:$0xff]
    %v49 = vld [vmem:[#allocation2 + $0x8] sm:$0xff]
    %v50 = vld [vmem:[#allocation2 + $0x10] sm:$0xff]
    %v51 = vld [vmem:[#allocation2 + $0x18] sm:$0xff]
    %v52 = vld [vmem:[#allocation2 + $0x20] sm:$0xff]
    %v53 = vld [vmem:[#allocation2 + $0x28] sm:$0xff]
    %v54 = vld [vmem:[#allocation2 + $0x30] sm:$0xff]
    %v55 = vld [vmem:[#allocation2 + $0x38] sm:$0xff]
    %v56 = vld [vmem:[#allocation2 + $0x40] sm:$0xff]
    %v57 = vld [vmem:[#allocation2 + $0x48] sm:$0xff]
    %v58 = vld [vmem:[#allocation2 + $0x50] sm:$0xff]
    %v59 = vld [vmem:[#allocation2 + $0x58] sm:$0xff]
    %v60 = vld [vmem:[#allocation2 + $0x60] sm:$0xff]
    %v61 = vld [vmem:[#allocation2 + $0x68] sm:$0xff]
    %v62 = vld [vmem:[#allocation2 + $0x70] sm:$0xff]
    %v63 = vld [vmem:[#allocation2 + $0x78] sm:$0xff]
    %v64 = vld [vmem:[#allocation2 + $0x80] sm:$0xff]
    %v65 = vld [vmem:[#allocation2 + $0x88] sm:$0xff]
    %v66 = vld [vmem:[#allocation2 + $0x90] sm:$0xff]
    %v67 = vld [vmem:[#allocation2 + $0x98] sm:$0xff]
    %v68 = vld [vmem:[#allocation2 + $0xa0] sm:$0xff]
    %v69 = vld [vmem:[#allocation2 + $0xa8] sm:$0xff]
    %v70 = vld [vmem:[#allocation2 + $0xb0] sm:$0xff]
    %v71 = vld [vmem:[#allocation2 + $0xb8] sm:$0xff]
    %v96 = vunpack.c.l.b16 %v48
    %v97 = vunpack.c.h.b16 %v48
    %v98 = vunpack.c.l.b16 %v49
    %v99 = vunpack.c.h.b16 %v49
    %v100 = vunpack.c.l.b16 %v50
    %v101 = vunpack.c.h.b16 %v50
    %v102 = vunpack.c.l.b16 %v51
    %v103 = vunpack.c.h.b16 %v51
    %v104 = vunpack.c.l.b16 %v52
    %v105 = vunpack.c.h.b16 %v52
    %v106 = vunpack.c.l.b16 %v53
    %v107 = vunpack.c.h.b16 %v53
    %v108 = vunpack.c.l.b16 %v54
    %v109 = vunpack.c.h.b16 %v54
    %v110 = vunpack.c.l.b16 %v55
    %v111 = vunpack.c.h.b16 %v55
    %v112 = vunpack.c.l.b16 %v56
    %v113 = vunpack.c.h.b16 %v56
    %v114 = vunpack.c.l.b16 %v57
    %v115 = vunpack.c.h.b16 %v57
    %v116 = vunpack.c.l.b16 %v58
    %v117 = vunpack.c.h.b16 %v58
    %v118 = vunpack.c.l.b16 %v59
    %v119 = vunpack.c.h.b16 %v59
    %v120 = vunpack.c.l.b16 %v60
    %v121 = vunpack.c.h.b16 %v60
    %v122 = vunpack.c.l.b16 %v61
    %v123 = vunpack.c.h.b16 %v61
    %v124 = vunpack.c.l.b16 %v62
    %v125 = vunpack.c.h.b16 %v62
    %v126 = vunpack.c.l.b16 %v63
    %v127 = vunpack.c.h.b16 %v63
    %v128 = vunpack.c.l.b16 %v64
    %v129 = vunpack.c.h.b16 %v64
    %v130 = vunpack.c.l.b16 %v65
    %v131 = vunpack.c.h.b16 %v65
    %v132 = vunpack.c.l.b16 %v66
    %v133 = vunpack.c.h.b16 %v66
    %v134 = vunpack.c.l.b16 %v67
    %v135 = vunpack.c.h.b16 %v67
    %v136 = vunpack.c.l.b16 %v68
    %v137 = vunpack.c.h.b16 %v68
    %v138 = vunpack.c.l.b16 %v69
    %v139 = vunpack.c.h.b16 %v69
    %v140 = vunpack.c.l.b16 %v70
    %v141 = vunpack.c.h.b16 %v70
    %v142 = vunpack.c.l.b16 %v71
    %v143 = vunpack.c.h.b16 %v71
    %v144 = vpack.c.b16 %v102, %v96
    %v145 = vpack.c.b16 %v103, %v97
    %v146 = vpack.c.b16 %v104, %v98
    %v147 = vpack.c.b16 %v105, %v99
    %v148 = vpack.c.b16 %v106, %v100
    %v149 = vpack.c.b16 %v107, %v101
    %v150 = vpack.c.b16 %v114, %v108
    %v151 = vpack.c.b16 %v115, %v109
    %v152 = vpack.c.b16 %v116, %v110
    %v153 = vpack.c.b16 %v117, %v111
    %v154 = vpack.c.b16 %v118, %v112
    %v155 = vpack.c.b16 %v119, %v113
    %v156 = vpack.c.b16 %v126, %v120
    %v157 = vpack.c.b16 %v127, %v121
    %v158 = vpack.c.b16 %v128, %v122
    %v159 = vpack.c.b16 %v129, %v123
    %v160 = vpack.c.b16 %v130, %v124
    %v161 = vpack.c.b16 %v131, %v125
    %v162 = vpack.c.b16 %v138, %v132
    %v163 = vpack.c.b16 %v139, %v133
    %v164 = vpack.c.b16 %v140, %v134
    %v165 = vpack.c.b16 %v141, %v135
    %v166 = vpack.c.b16 %v142, %v136
    %v167 = vpack.c.b16 %v143, %v137
    %vm192 = vcmask 523264
    %v194 = vsel %vm192, %v46, 0
    %v197 = vsel %vm192, %v47, 0
    %199 = vmatprep.subr.bf16.mxu0 0
    %200 = vmatpush1.bf16.msra.mxu0 0
    %201 = vmatprep.subr.bf16.mxu0 0
    %202 = vmatpush1.bf16.msra.mxu0 0
    %203 = vmatprep.subr.bf16.mxu0 0
    %204 = vmatpush1.bf16.msra.mxu0 0
    %205 = vmatprep.subr.bf16.mxu0 0
    %206 = vmatpush1.bf16.msra.mxu0 0
    %207 = vmatprep.subr.bf16.mxu0 %v163
    %208 = vmatpush1.bf16.msra.mxu0 %v162
    %209 = vmatprep.subr.bf16.mxu0 %v157
    %210 = vmatpush1.bf16.msra.mxu0 %v156
    %211 = vmatprep.subr.bf16.mxu0 %v151
    %212 = vmatpush1.bf16.msra.mxu0 %v150
    %213 = vmatprep.subr.bf16.mxu0 %v145
    %214 = vmatpush1.bf16.msra.mxu0 %v144
    %215 = vmatprep.subr.bf16.mxu0 0
    %216 = vmatpush2.bf16.msra.mxu0 0
    %217 = vmatprep.subr.bf16.mxu0 0
    %218 = vmatpush2.bf16.msra.mxu0 0
    %219 = vmatprep.subr.bf16.mxu0 0
    %220 = vmatpush2.bf16.msra.mxu0 0
    %221 = vmatprep.subr.bf16.mxu0 0
    %222 = vmatpush2.bf16.msra.mxu0 0
    %223 = vmatprep.subr.bf16.mxu0 0
    %224 = vmatpush2.bf16.msra.mxu0 0
    %225 = vmatprep.subr.bf16.mxu0 0
    %226 = vmatpush2.bf16.msra.mxu0 0
    %227 = vmatprep.subr.bf16.mxu0 0
    %228 = vmatpush2.bf16.msra.mxu0 0
    %229 = vmatprep.subr.bf16.mxu0 0
    %230 = vmatpush2.bf16.msra.mxu0 0
    %231 = vmatprep.mubr.bf16.mxu0 0
    %232 = vmatmul.mubr.bf16.gmra.mxu0 %v194
    %v233 = vpop.f32.mrf.mxu0
    %v234 = vadd.f32 0.0, %v233
    %v235 = vpop.f32.mrf.mxu0
    %v236 = vadd.f32 0.0, %v235
    %v237 = vpop.f32.mrf.mxu0
    %v238 = vadd.f32 0.0, %v237
    %v239 = vpop.f32.mrf.mxu0
    %v240 = vadd.f32 0.0, %v239
    %241 = vmatprep.mubr.bf16.mxu0 0
    %242 = vmatmul.mubr.bf16.gmra.mxu0 %v197
    %v243 = vpop.f32.mrf.mxu0
    %v244 = vadd.f32 0.0, %v243
    %v245 = vpop.f32.mrf.mxu0
    %v246 = vadd.f32 0.0, %v245
    %v247 = vpop.f32.mrf.mxu0
    %v248 = vadd.f32 0.0, %v247
    %v249 = vpop.f32.mrf.mxu0
    %v250 = vadd.f32 0.0, %v249
    %251 = vdwg.mxu0
    %252 = vmatprep.subr.bf16.mxu0 0
    %253 = vmatpush1.bf16.msra.mxu0 0
    %254 = vmatprep.subr.bf16.mxu0 0
    %255 = vmatpush1.bf16.msra.mxu0 0
    %256 = vmatprep.subr.bf16.mxu0 0
    %257 = vmatpush1.bf16.msra.mxu0 0
    %258 = vmatprep.subr.bf16.mxu0 0
    %259 = vmatpush1.bf16.msra.mxu0 0
    %260 = vmatprep.subr.bf16.mxu0 %v165
    %261 = vmatpush1.bf16.msra.mxu0 %v164
    %262 = vmatprep.subr.bf16.mxu0 %v159
    %263 = vmatpush1.bf16.msra.mxu0 %v158
    %264 = vmatprep.subr.bf16.mxu0 %v153
    %265 = vmatpush1.bf16.msra.mxu0 %v152
    %266 = vmatprep.subr.bf16.mxu0 %v147
    %267 = vmatpush1.bf16.msra.mxu0 %v146
    %268 = vmatprep.subr.bf16.mxu0 0
    %269 = vmatpush2.bf16.msra.mxu0 0
    %270 = vmatprep.subr.bf16.mxu0 0
    %271 = vmatpush2.bf16.msra.mxu0 0
    %272 = vmatprep.subr.bf16.mxu0 0
    %273 = vmatpush2.bf16.msra.mxu0 0
    %274 = vmatprep.subr.bf16.mxu0 0
    %275 = vmatpush2.bf16.msra.mxu0 0
    %276 = vmatprep.subr.bf16.mxu0 0
    %277 = vmatpush2.bf16.msra.mxu0 0
    %278 = vmatprep.subr.bf16.mxu0 0
    %279 = vmatpush2.bf16.msra.mxu0 0
    %280 = vmatprep.subr.bf16.mxu0 0
    %281 = vmatpush2.bf16.msra.mxu0 0
    %282 = vmatprep.subr.bf16.mxu0 0
    %283 = vmatpush2.bf16.msra.mxu0 0
    %284 = vmatprep.mubr.bf16.mxu0 0
    %285 = vmatmul.mubr.bf16.gmra.mxu0 %v194
    %v286 = vpop.f32.mrf.mxu0
    %v287 = vadd.f32 0.0, %v286
    %v288 = vpop.f32.mrf.mxu0
    %v289 = vadd.f32 0.0, %v288
    %v290 = vpop.f32.mrf.mxu0
    %v291 = vadd.f32 0.0, %v290
    %v292 = vpop.f32.mrf.mxu0
    %v293 = vadd.f32 0.0, %v292
    %294 = vmatprep.mubr.bf16.mxu0 0
    %295 = vmatmul.mubr.bf16.gmra.mxu0 %v197
    %v296 = vpop.f32.mrf.mxu0
    %v297 = vadd.f32 0.0, %v296
    %v298 = vpop.f32.mrf.mxu0
    %v299 = vadd.f32 0.0, %v298
    %v300 = vpop.f32.mrf.mxu0
    %v301 = vadd.f32 0.0, %v300
    %v302 = vpop.f32.mrf.mxu0
    %v303 = vadd.f32 0.0, %v302
    %304 = vdwg.mxu0
    %305 = vmatprep.subr.bf16.mxu0 0
    %306 = vmatpush1.bf16.msra.mxu0 0
    %307 = vmatprep.subr.bf16.mxu0 0
    %308 = vmatpush1.bf16.msra.mxu0 0
    %309 = vmatprep.subr.bf16.mxu0 0
    %310 = vmatpush1.bf16.msra.mxu0 0
    %311 = vmatprep.subr.bf16.mxu0 0
    %312 = vmatpush1.bf16.msra.mxu0 0
    %313 = vmatprep.subr.bf16.mxu0 %v167
    %314 = vmatpush1.bf16.msra.mxu0 %v166
    %315 = vmatprep.subr.bf16.mxu0 %v161
    %316 = vmatpush1.bf16.msra.mxu0 %v160
    %317 = vmatprep.subr.bf16.mxu0 %v155
    %318 = vmatpush1.bf16.msra.mxu0 %v154
    %319 = vmatprep.subr.bf16.mxu0 %v149
    %320 = vmatpush1.bf16.msra.mxu0 %v148
    %321 = vmatprep.subr.bf16.mxu0 0
    %322 = vmatpush2.bf16.msra.mxu0 0
    %323 = vmatprep.subr.bf16.mxu0 0
    %324 = vmatpush2.bf16.msra.mxu0 0
    %325 = vmatprep.subr.bf16.mxu0 0
    %326 = vmatpush2.bf16.msra.mxu0 0
    %327 = vmatprep.subr.bf16.mxu0 0
    %328 = vmatpush2.bf16.msra.mxu0 0
    %329 = vmatprep.subr.bf16.mxu0 0
    %330 = vmatpush2.bf16.msra.mxu0 0
    %331 = vmatprep.subr.bf16.mxu0 0
    %332 = vmatpush2.bf16.msra.mxu0 0
    %333 = vmatprep.subr.bf16.mxu0 0
    %334 = vmatpush2.bf16.msra.mxu0 0
    %335 = vmatprep.subr.bf16.mxu0 0
    %336 = vmatpush2.bf16.msra.mxu0 0
    %337 = vmatprep.mubr.bf16.mxu0 0
    %338 = vmatmul.mubr.bf16.gmra.mxu0 %v194
    %v339 = vpop.f32.mrf.mxu0
    %v340 = vadd.f32 0.0, %v339
    %v341 = vpop.f32.mrf.mxu0
    %v342 = vadd.f32 0.0, %v341
    %v343 = vpop.f32.mrf.mxu0
    %v344 = vadd.f32 0.0, %v343
    %v345 = vpop.f32.mrf.mxu0
    %v346 = vadd.f32 0.0, %v345
    %347 = vmatprep.mubr.bf16.mxu0 0
    %348 = vmatmul.mubr.bf16.gmra.mxu0 %v197
    %v349 = vpop.f32.mrf.mxu0
    %v350 = vadd.f32 0.0, %v349
    %v351 = vpop.f32.mrf.mxu0
    %v352 = vadd.f32 0.0, %v351
    %v353 = vpop.f32.mrf.mxu0
    %v354 = vadd.f32 0.0, %v353
    %v355 = vpop.f32.mrf.mxu0
    %v356 = vadd.f32 0.0, %v355
    %357 = vdwg.mxu0
    %v358 = vpack.c.bf16 %v238, %v234
    %v359 = vpack.c.bf16 %v240, %v236
    %v360 = vpack.c.bf16 %v248, %v244
    %v361 = vpack.c.bf16 %v250, %v246
    %v362 = vpack.c.bf16 %v291, %v287
    %v363 = vpack.c.bf16 %v293, %v289
    %v364 = vpack.c.bf16 %v301, %v297
    %v365 = vpack.c.bf16 %v303, %v299
    %v366 = vpack.c.bf16 %v344, %v340
    %v367 = vpack.c.bf16 %v346, %v342
    %v368 = vpack.c.bf16 %v354, %v350
    %v369 = vpack.c.bf16 %v356, %v352
    %v370 = vld [vmem:[%s4 + $0xa0] sm:$0xf]
    %v371 = vld [vmem:[%s4 + $0xa8] sm:$0xf]
    %v372 = vld [vmem:[%s5] ss:$8 sm:$0x3]
    %v374 = vlaneseq
    %v375 = vshrl.u32 %v374, 7
    %v376 = vsub.s32 0, %v375
    %v377 = vrot.slane %v372, %v376
    %v378 = vlaneseq
    %v379 = vshrl.u32 %v378, 7
    %v380 = vsub.s32 1, %v379
    %v381 = vrot.slane %v372, %v380
    %v386 = vunpack.c.l.b16 %v370
    %v387 = vunpack.c.l.b16 %v371
    %v388 = vpack.c.b16 %v387, %v386
    %vm389 = vcmask 785408
    %v391 = vsel %vm389, %v388, 0
    %393 = vmatprep.subr.bf16.mxu0 0
    %394 = vmatpush1.bf16.msra.mxu0 0
    %395 = vmatprep.subr.bf16.mxu0 0
    %396 = vmatpush1.bf16.msra.mxu0 0
    %397 = vmatprep.subr.bf16.mxu0 %v369
    %398 = vmatpush1.bf16.msra.mxu0 %v368
    %399 = vmatprep.subr.bf16.mxu0 %v367
    %400 = vmatpush1.bf16.msra.mxu0 %v366
    %401 = vmatprep.subr.bf16.mxu0 %v365
    %402 = vmatpush1.bf16.msra.mxu0 %v364
    %403 = vmatprep.subr.bf16.mxu0 %v363
    %404 = vmatpush1.bf16.msra.mxu0 %v362
    %405 = vmatprep.subr.bf16.mxu0 %v361
    %406 = vmatpush1.bf16.msra.mxu0 %v360
    %407 = vmatprep.subr.bf16.mxu0 %v359
    %408 = vmatpush1.bf16.msra.mxu0 %v358
    %409 = vmatprep.subr.bf16.mxu0 0
    %410 = vmatpush2.bf16.msra.mxu0 0
    %411 = vmatprep.subr.bf16.mxu0 0
    %412 = vmatpush2.bf16.msra.mxu0 0
    %413 = vmatprep.subr.bf16.mxu0 0
    %414 = vmatpush2.bf16.msra.mxu0 0
    %415 = vmatprep.subr.bf16.mxu0 0
    %416 = vmatpush2.bf16.msra.mxu0 0
    %417 = vmatprep.subr.bf16.mxu0 0
    %418 = vmatpush2.bf16.msra.mxu0 0
    %419 = vmatprep.subr.bf16.mxu0 0
    %420 = vmatpush2.bf16.msra.mxu0 0
    %421 = vmatprep.subr.bf16.mxu0 0
    %422 = vmatpush2.bf16.msra.mxu0 0
    %423 = vmatprep.subr.bf16.mxu0 0
    %424 = vmatpush2.bf16.msra.mxu0 0
    %425 = vmatprep.mubr.bf16.mxu0 0
    %426 = vmatmul.mubr.bf16.gmra.mxu0 %v391
    %v427 = vpop.f32.mrf.mxu0
    %v428 = vadd.f32 %v377, %v427
    %v429 = vpop.f32.mrf.mxu0
    %v430 = vadd.f32 %v381, %v429
    %v431 = vpop.f32.mrf.mxu0
    %v432 = vadd.f32 %v377, %v431
    %v433 = vpop.f32.mrf.mxu0
    %v434 = vadd.f32 %v381, %v433
    %435 = vdwg.mxu0
    %vm436 = vcmp.gt.f32.partialorder %v428, 0.0
    %vm437 = vcmp.gt.f32.partialorder %v430, 0.0
    %vm438 = vcmp.gt.f32.partialorder %v432, 0.0
    %vm439 = vcmp.gt.f32.partialorder %v434, 0.0
    %v440 = vmin.f32 %v428, 0.0
    %v441 = vmin.f32 %v430, 0.0
    %v442 = vmin.f32 %v432, 0.0
    %v443 = vmin.f32 %v434, 0.0
    %v444 = vmul.f32 %v440, 1.442695
    %v445 = vpow.pop %v444
    %v446 = vmul.f32 %v441, 1.442695
    %v447 = vpow.pop %v446
    %v448 = vmul.f32 %v442, 1.442695
    %v449 = vpow.pop %v448
    %v450 = vmul.f32 %v443, 1.442695
    %v451 = vpow.pop %v450
    %v452 = vsub.f32 %v445, 1.0
    %v453 = vsub.f32 %v447, 1.0
    %v454 = vsub.f32 %v449, 1.0
    %v455 = vsub.f32 %v451, 1.0
    %v456 = vsel %vm436, %v428, %v452
    %v457 = vsel %vm437, %v430, %v453
    %v458 = vsel %vm438, %v432, %v454
    %v459 = vsel %vm439, %v434, %v455
    %v460 = vpack.c.bf16 %v458, %v456
    %v461 = vpack.c.bf16 %v459, %v457
    %v462 = vld [vmem:[#allocation2 + $0xc0] sm:$0xff]
    %v463 = vld [vmem:[#allocation2 + $0xc8] sm:$0xff]
    %v464 = vld [vmem:[#allocation2 + $0xd0] sm:$0xff]
    %v465 = vld [vmem:[#allocation2 + $0xd8] sm:$0xff]
    %v466 = vld [vmem:[#allocation2 + $0xe0] sm:$0xff]
    %v467 = vld [vmem:[#allocation2 + $0xe8] sm:$0xff]
    %v468 = vld [vmem:[#allocation2 + $0xf0] sm:$0xff]
    %v469 = vld [vmem:[#allocation2 + $0xf8] sm:$0xff]
    %v470 = vld [vmem:[#allocation2 + $0x100] sm:$0xff]
    %v471 = vld [vmem:[#allocation2 + $0x108] sm:$0xff]
    %v472 = vld [vmem:[#allocation2 + $0x110] sm:$0xff]
    %v473 = vld [vmem:[#allocation2 + $0x118] sm:$0xff]
    %v474 = vld [vmem:[#allocation2 + $0x120] sm:$0xff]
    %v475 = vld [vmem:[#allocation2 + $0x128] sm:$0xff]
    %v476 = vld [vmem:[#allocation2 + $0x130] sm:$0xff]
    %v477 = vld [vmem:[#allocation2 + $0x138] sm:$0xff]
    %v478 = vld [vmem:[#allocation2 + $0x140] sm:$0xff]
    %v479 = vld [vmem:[#allocation2 + $0x148] sm:$0xff]
    %v480 = vld [vmem:[#allocation2 + $0x150] sm:$0xff]
    %v481 = vld [vmem:[#allocation2 + $0x158] sm:$0xff]
    %v482 = vld [vmem:[#allocation2 + $0x160] sm:$0xff]
    %v483 = vld [vmem:[#allocation2 + $0x168] sm:$0xff]
    %v484 = vld [vmem:[#allocation2 + $0x170] sm:$0xff]
    %v485 = vld [vmem:[#allocation2 + $0x178] sm:$0xff]
    %v486 = vld [vmem:[#allocation2 + $0x180] sm:$0xff]
    %v487 = vld [vmem:[#allocation2 + $0x188] sm:$0xff]
    %v488 = vld [vmem:[#allocation2 + $0x190] sm:$0xff]
    %v489 = vld [vmem:[#allocation2 + $0x198] sm:$0xff]
    %v490 = vld [vmem:[#allocation2 + $0x1a0] sm:$0xff]
    %v491 = vld [vmem:[#allocation2 + $0x1a8] sm:$0xff]
    %v492 = vld [vmem:[#allocation2 + $0x1b0] sm:$0xff]
    %v493 = vld [vmem:[#allocation2 + $0x1b8] sm:$0xff]
    %v494 = vld [vmem:[#allocation2 + $0x1c0] sm:$0xff]
    %v495 = vld [vmem:[#allocation2 + $0x1c8] sm:$0xff]
    %v496 = vld [vmem:[#allocation2 + $0x1d0] sm:$0xff]
    %v497 = vld [vmem:[#allocation2 + $0x1d8] sm:$0xff]
    %v498 = vld [vmem:[#allocation2 + $0x1e0] sm:$0xff]
    %v499 = vld [vmem:[#allocation2 + $0x1e8] sm:$0xff]
    %v500 = vld [vmem:[#allocation2 + $0x1f0] sm:$0xff]
    %v501 = vld [vmem:[#allocation2 + $0x1f8] sm:$0xff]
    %v502 = vld [vmem:[#allocation2 + $0x200] sm:$0xff]
    %v503 = vld [vmem:[#allocation2 + $0x208] sm:$0xff]
    %v504 = vld [vmem:[#allocation2 + $0x210] sm:$0xff]
    %v505 = vld [vmem:[#allocation2 + $0x218] sm:$0xff]
    %v506 = vld [vmem:[#allocation2 + $0x220] sm:$0xff]
    %v507 = vld [vmem:[#allocation2 + $0x228] sm:$0xff]
    %v508 = vld [vmem:[#allocation2 + $0x230] sm:$0xff]
    %v509 = vld [vmem:[#allocation2 + $0x238] sm:$0xff]
    %v510 = vld [vmem:[#allocation2 + $0x240] sm:$0xff]
    %v511 = vld [vmem:[#allocation2 + $0x248] sm:$0xff]
    %v512 = vld [vmem:[#allocation2 + $0x250] sm:$0xff]
    %v513 = vld [vmem:[#allocation2 + $0x258] sm:$0xff]
    %v514 = vld [vmem:[#allocation2 + $0x260] sm:$0xff]
    %v515 = vld [vmem:[#allocation2 + $0x268] sm:$0xff]
    %v516 = vld [vmem:[#allocation2 + $0x270] sm:$0xff]
    %v517 = vld [vmem:[#allocation2 + $0x278] sm:$0xff]
    %v518 = vld [vmem:[#allocation2 + $0x280] sm:$0xff]
    %v519 = vld [vmem:[#allocation2 + $0x288] sm:$0xff]
    %v520 = vld [vmem:[#allocation2 + $0x290] sm:$0xff]
    %v521 = vld [vmem:[#allocation2 + $0x298] sm:$0xff]
    %v522 = vld [vmem:[#allocation2 + $0x2a0] sm:$0xff]
    %v523 = vld [vmem:[#allocation2 + $0x2a8] sm:$0xff]
    %v524 = vld [vmem:[#allocation2 + $0x2b0] sm:$0xff]
    %v525 = vld [vmem:[#allocation2 + $0x2b8] sm:$0xff]
    %v526 = vld [vmem:[#allocation2 + $0x2c0] sm:$0xff]
    %v527 = vld [vmem:[#allocation2 + $0x2c8] sm:$0xff]
    %v528 = vld [vmem:[#allocation2 + $0x2d0] sm:$0xff]
    %v529 = vld [vmem:[#allocation2 + $0x2d8] sm:$0xff]
    %v530 = vld [vmem:[#allocation2 + $0x2e0] sm:$0xff]
    %v531 = vld [vmem:[#allocation2 + $0x2e8] sm:$0xff]
    %v532 = vld [vmem:[#allocation2 + $0x2f0] sm:$0xff]
    %v533 = vld [vmem:[#allocation2 + $0x2f8] sm:$0xff]
    %v534 = vld [vmem:[#allocation2 + $0x300] sm:$0xff]
    %v535 = vld [vmem:[#allocation2 + $0x308] sm:$0xff]
    %v536 = vld [vmem:[#allocation2 + $0x310] sm:$0xff]
    %v537 = vld [vmem:[#allocation2 + $0x318] sm:$0xff]
    %v538 = vld [vmem:[#allocation2 + $0x320] sm:$0xff]
    %v539 = vld [vmem:[#allocation2 + $0x328] sm:$0xff]
    %v540 = vld [vmem:[#allocation2 + $0x330] sm:$0xff]
    %v541 = vld [vmem:[#allocation2 + $0x338] sm:$0xff]
    %v542 = vld [vmem:[#allocation2 + $0x340] sm:$0xff]
    %v543 = vld [vmem:[#allocation2 + $0x348] sm:$0xff]
    %v544 = vld [vmem:[#allocation2 + $0x350] sm:$0xff]
    %v545 = vld [vmem:[#allocation2 + $0x358] sm:$0xff]
    %v630 = vunpack.c.l.b16 %v462
    %v631 = vunpack.c.h.b16 %v462
    %v632 = vunpack.c.l.b16 %v463
    %v633 = vunpack.c.h.b16 %v463
    %v634 = vunpack.c.l.b16 %v464
    %v635 = vunpack.c.h.b16 %v464
    %v636 = vunpack.c.l.b16 %v465
    %v637 = vunpack.c.h.b16 %v465
    %v638 = vunpack.c.l.b16 %v466
    %v639 = vunpack.c.h.b16 %v466
    %v640 = vunpack.c.l.b16 %v467
    %v641 = vunpack.c.h.b16 %v467
    %v642 = vunpack.c.l.b16 %v468
    %v643 = vunpack.c.h.b16 %v468
    %v644 = vunpack.c.l.b16 %v469
    %v645 = vunpack.c.h.b16 %v469
    %v646 = vunpack.c.l.b16 %v470
    %v647 = vunpack.c.h.b16 %v470
    %v648 = vunpack.c.l.b16 %v471
    %v649 = vunpack.c.h.b16 %v471
    %v650 = vunpack.c.l.b16 %v472
    %v651 = vunpack.c.h.b16 %v472
    %v652 = vunpack.c.l.b16 %v473
    %v653 = vunpack.c.h.b16 %v473
    %v654 = vunpack.c.l.b16 %v474
    %v655 = vunpack.c.h.b16 %v474
    %v656 = vunpack.c.l.b16 %v475
    %v657 = vunpack.c.h.b16 %v475
    %v658 = vunpack.c.l.b16 %v476
    %v659 = vunpack.c.h.b16 %v476
    %v660 = vunpack.c.l.b16 %v477
    %v661 = vunpack.c.h.b16 %v477
    %v662 = vunpack.c.l.b16 %v478
    %v663 = vunpack.c.h.b16 %v478
    %v664 = vunpack.c.l.b16 %v479
    %v665 = vunpack.c.h.b16 %v479
    %v666 = vunpack.c.l.b16 %v480
    %v667 = vunpack.c.h.b16 %v480
    %v668 = vunpack.c.l.b16 %v481
    %v669 = vunpack.c.h.b16 %v481
    %v670 = vunpack.c.l.b16 %v482
    %v671 = vunpack.c.h.b16 %v482
    %v672 = vunpack.c.l.b16 %v483
    %v673 = vunpack.c.h.b16 %v483
    %v674 = vunpack.c.l.b16 %v484
    %v675 = vunpack.c.h.b16 %v484
    %v676 = vunpack.c.l.b16 %v485
    %v677 = vunpack.c.h.b16 %v485
    %v678 = vunpack.c.l.b16 %v486
    %v679 = vunpack.c.h.b16 %v486
    %v680 = vunpack.c.l.b16 %v487
    %v681 = vunpack.c.h.b16 %v487
    %v682 = vunpack.c.l.b16 %v488
    %v683 = vunpack.c.h.b16 %v488
    %v684 = vunpack.c.l.b16 %v489
    %v685 = vunpack.c.h.b16 %v489
    %v686 = vunpack.c.l.b16 %v490
    %v687 = vunpack.c.h.b16 %v490
    %v688 = vunpack.c.l.b16 %v491
    %v689 = vunpack.c.h.b16 %v491
    %v690 = vunpack.c.l.b16 %v492
    %v691 = vunpack.c.h.b16 %v492
    %v692 = vunpack.c.l.b16 %v493
    %v693 = vunpack.c.h.b16 %v493
    %v694 = vunpack.c.l.b16 %v494
    %v695 = vunpack.c.h.b16 %v494
    %v696 = vunpack.c.l.b16 %v495
    %v697 = vunpack.c.h.b16 %v495
    %v698 = vunpack.c.l.b16 %v496
    %v699 = vunpack.c.h.b16 %v496
    %v700 = vunpack.c.l.b16 %v497
    %v701 = vunpack.c.h.b16 %v497
    %v702 = vunpack.c.l.b16 %v498
    %v703 = vunpack.c.h.b16 %v498
    %v704 = vunpack.c.l.b16 %v499
    %v705 = vunpack.c.h.b16 %v499
    %v706 = vunpack.c.l.b16 %v500
    %v707 = vunpack.c.h.b16 %v500
    %v708 = vunpack.c.l.b16 %v501
    %v709 = vunpack.c.h.b16 %v501
    %v710 = vunpack.c.l.b16 %v502
    %v711 = vunpack.c.h.b16 %v502
    %v712 = vunpack.c.l.b16 %v503
    %v713 = vunpack.c.h.b16 %v503
    %v714 = vunpack.c.l.b16 %v504
    %v715 = vunpack.c.h.b16 %v504
    %v716 = vunpack.c.l.b16 %v505
    %v717 = vunpack.c.h.b16 %v505
    %v718 = vunpack.c.l.b16 %v506
    %v719 = vunpack.c.h.b16 %v506
    %v720 = vunpack.c.l.b16 %v507
    %v721 = vunpack.c.h.b16 %v507
    %v722 = vunpack.c.l.b16 %v508
    %v723 = vunpack.c.h.b16 %v508
    %v724 = vunpack.c.l.b16 %v509
    %v725 = vunpack.c.h.b16 %v509
    %v726 = vunpack.c.l.b16 %v510
    %v727 = vunpack.c.h.b16 %v510
    %v728 = vunpack.c.l.b16 %v511
    %v729 = vunpack.c.h.b16 %v511
    %v730 = vunpack.c.l.b16 %v512
    %v731 = vunpack.c.h.b16 %v512
    %v732 = vunpack.c.l.b16 %v513
    %v733 = vunpack.c.h.b16 %v513
    %v734 = vunpack.c.l.b16 %v514
    %v735 = vunpack.c.h.b16 %v514
    %v736 = vunpack.c.l.b16 %v515
    %v737 = vunpack.c.h.b16 %v515
    %v738 = vunpack.c.l.b16 %v516
    %v739 = vunpack.c.h.b16 %v516
    %v740 = vunpack.c.l.b16 %v517
    %v741 = vunpack.c.h.b16 %v517
    %v742 = vunpack.c.l.b16 %v518
    %v743 = vunpack.c.h.b16 %v518
    %v744 = vunpack.c.l.b16 %v519
    %v745 = vunpack.c.h.b16 %v519
    %v746 = vunpack.c.l.b16 %v520
    %v747 = vunpack.c.h.b16 %v520
    %v748 = vunpack.c.l.b16 %v521
    %v749 = vunpack.c.h.b16 %v521
    %v750 = vunpack.c.l.b16 %v522
    %v751 = vunpack.c.h.b16 %v522
    %v752 = vunpack.c.l.b16 %v523
    %v753 = vunpack.c.h.b16 %v523
    %v754 = vunpack.c.l.b16 %v524
    %v755 = vunpack.c.h.b16 %v524
    %v756 = vunpack.c.l.b16 %v525
    %v757 = vunpack.c.h.b16 %v525
    %v758 = vunpack.c.l.b16 %v526
    %v759 = vunpack.c.h.b16 %v526
    %v760 = vunpack.c.l.b16 %v527
    %v761 = vunpack.c.h.b16 %v527
    %v762 = vunpack.c.l.b16 %v528
    %v763 = vunpack.c.h.b16 %v528
    %v764 = vunpack.c.l.b16 %v529
    %v765 = vunpack.c.h.b16 %v529
    %v766 = vunpack.c.l.b16 %v530
    %v767 = vunpack.c.h.b16 %v530
    %v768 = vunpack.c.l.b16 %v531
    %v769 = vunpack.c.h.b16 %v531
    %v770 = vunpack.c.l.b16 %v532
    %v771 = vunpack.c.h.b16 %v532
    %v772 = vunpack.c.l.b16 %v533
    %v773 = vunpack.c.h.b16 %v533
    %v774 = vunpack.c.l.b16 %v534
    %v775 = vunpack.c.h.b16 %v534
    %v776 = vunpack.c.l.b16 %v535
    %v777 = vunpack.c.h.b16 %v535
    %v778 = vunpack.c.l.b16 %v536
    %v779 = vunpack.c.h.b16 %v536
    %v780 = vunpack.c.l.b16 %v537
    %v781 = vunpack.c.h.b16 %v537
    %v782 = vunpack.c.l.b16 %v538
    %v783 = vunpack.c.h.b16 %v538
    %v784 = vunpack.c.l.b16 %v539
    %v785 = vunpack.c.h.b16 %v539
    %v786 = vunpack.c.l.b16 %v540
    %v787 = vunpack.c.h.b16 %v540
    %v788 = vunpack.c.l.b16 %v541
    %v789 = vunpack.c.h.b16 %v541
    %v790 = vunpack.c.l.b16 %v542
    %v791 = vunpack.c.h.b16 %v542
    %v792 = vunpack.c.l.b16 %v543
    %v793 = vunpack.c.h.b16 %v543
    %v794 = vunpack.c.l.b16 %v544
    %v795 = vunpack.c.h.b16 %v544
    %v796 = vunpack.c.l.b16 %v545
    %v797 = vunpack.c.h.b16 %v545
    %v798 = vpack.c.b16 %v636, %v630
    %v799 = vpack.c.b16 %v637, %v631
    %v800 = vpack.c.b16 %v638, %v632
    %v801 = vpack.c.b16 %v639, %v633
    %v802 = vpack.c.b16 %v640, %v634
    %v803 = vpack.c.b16 %v641, %v635
    %v804 = vpack.c.b16 %v648, %v642
    %v805 = vpack.c.b16 %v649, %v643
    %v806 = vpack.c.b16 %v650, %v644
    %v807 = vpack.c.b16 %v651, %v645
    %v808 = vpack.c.b16 %v652, %v646
    %v809 = vpack.c.b16 %v653, %v647
    %v810 = vpack.c.b16 %v660, %v654
    %v811 = vpack.c.b16 %v661, %v655
    %v812 = vpack.c.b16 %v662, %v656
    %v813 = vpack.c.b16 %v663, %v657
    %v814 = vpack.c.b16 %v664, %v658
    %v815 = vpack.c.b16 %v665, %v659
    %v816 = vpack.c.b16 %v672, %v666
    %v817 = vpack.c.b16 %v673, %v667
    %v818 = vpack.c.b16 %v674, %v668
    %v819 = vpack.c.b16 %v675, %v669
    %v820 = vpack.c.b16 %v676, %v670
    %v821 = vpack.c.b16 %v677, %v671
    %v822 = vpack.c.b16 %v684, %v678
    %v823 = vpack.c.b16 %v685, %v679
    %v824 = vpack.c.b16 %v686, %v680
    %v825 = vpack.c.b16 %v687, %v681
    %v826 = vpack.c.b16 %v688, %v682
    %v827 = vpack.c.b16 %v689, %v683
    %v828 = vpack.c.b16 %v696, %v690
    %v829 = vpack.c.b16 %v697, %v691
    %v830 = vpack.c.b16 %v698, %v692
    %v831 = vpack.c.b16 %v699, %v693
    %v832 = vpack.c.b16 %v700, %v694
    %v833 = vpack.c.b16 %v701, %v695
    %v834 = vpack.c.b16 %v708, %v702
    %v835 = vpack.c.b16 %v709, %v703
    %v836 = vpack.c.b16 %v710, %v704
    %v837 = vpack.c.b16 %v711, %v705
    %v838 = vpack.c.b16 %v712, %v706
    %v839 = vpack.c.b16 %v713, %v707
    %v840 = vpack.c.b16 %v720, %v714
    %v841 = vpack.c.b16 %v721, %v715
    %v842 = vpack.c.b16 %v722, %v716
    %v843 = vpack.c.b16 %v723, %v717
    %v844 = vpack.c.b16 %v724, %v718
    %v845 = vpack.c.b16 %v725, %v719
    %v846 = vpack.c.b16 %v732, %v726
    %v847 = vpack.c.b16 %v733, %v727
    %v848 = vpack.c.b16 %v734, %v728
    %v849 = vpack.c.b16 %v735, %v729
    %v850 = vpack.c.b16 %v736, %v730
    %v851 = vpack.c.b16 %v737, %v731
    %v852 = vpack.c.b16 %v744, %v738
    %v853 = vpack.c.b16 %v745, %v739
    %v854 = vpack.c.b16 %v746, %v740
    %v855 = vpack.c.b16 %v747, %v741
    %v856 = vpack.c.b16 %v748, %v742
    %v857 = vpack.c.b16 %v749, %v743
    %v858 = vpack.c.b16 %v756, %v750
    %v859 = vpack.c.b16 %v757, %v751
    %v860 = vpack.c.b16 %v758, %v752
    %v861 = vpack.c.b16 %v759, %v753
    %v862 = vpack.c.b16 %v760, %v754
    %v863 = vpack.c.b16 %v761, %v755
    %v864 = vpack.c.b16 %v768, %v762
    %v865 = vpack.c.b16 %v769, %v763
    %v866 = vpack.c.b16 %v770, %v764
    %v867 = vpack.c.b16 %v771, %v765
    %v868 = vpack.c.b16 %v772, %v766
    %v869 = vpack.c.b16 %v773, %v767
    %v870 = vpack.c.b16 %v780, %v774
    %v871 = vpack.c.b16 %v781, %v775
    %v872 = vpack.c.b16 %v782, %v776
    %v873 = vpack.c.b16 %v783, %v777
    %v874 = vpack.c.b16 %v784, %v778
    %v875 = vpack.c.b16 %v785, %v779
    %v876 = vpack.c.b16 %v792, %v786
    %v877 = vpack.c.b16 %v793, %v787
    %v878 = vpack.c.b16 %v794, %v788
    %v879 = vpack.c.b16 %v795, %v789
    %v880 = vpack.c.b16 %v796, %v790
    %v881 = vpack.c.b16 %v797, %v791
    %v967 = vsel %vm389, %v461, 0
    %969 = vmatprep.subr.bf16.mxu0 %v841
    %970 = vmatpush1.bf16.msra.mxu0 %v840
    %971 = vmatprep.subr.bf16.mxu0 %v835
    %972 = vmatpush1.bf16.msra.mxu0 %v834
    %973 = vmatprep.subr.bf16.mxu0 %v829
    %974 = vmatpush1.bf16.msra.mxu0 %v828
    %975 = vmatprep.subr.bf16.mxu0 %v823
    %976 = vmatpush1.bf16.msra.mxu0 %v822
    %977 = vmatprep.subr.bf16.mxu0 %v817
    %978 = vmatpush1.bf16.msra.mxu0 %v816
    %979 = vmatprep.subr.bf16.mxu0 %v811
    %980 = vmatpush1.bf16.msra.mxu0 %v810
    %981 = vmatprep.subr.bf16.mxu0 %v805
    %982 = vmatpush1.bf16.msra.mxu0 %v804
    %983 = vmatprep.subr.bf16.mxu0 %v799
    %984 = vmatpush1.bf16.msra.mxu0 %v798
    %985 = vmatprep.subr.bf16.mxu0 0
    %986 = vmatpush2.bf16.msra.mxu0 0
    %987 = vmatprep.subr.bf16.mxu0 0
    %988 = vmatpush2.bf16.msra.mxu0 0
    %989 = vmatprep.subr.bf16.mxu0 %v877
    %990 = vmatpush2.bf16.msra.mxu0 %v876
    %991 = vmatprep.subr.bf16.mxu0 %v871
    %992 = vmatpush2.bf16.msra.mxu0 %v870
    %993 = vmatprep.subr.bf16.mxu0 %v865
    %994 = vmatpush2.bf16.msra.mxu0 %v864
    %995 = vmatprep.subr.bf16.mxu0 %v859
    %996 = vmatpush2.bf16.msra.mxu0 %v858
    %997 = vmatprep.subr.bf16.mxu0 %v853
    %998 = vmatpush2.bf16.msra.mxu0 %v852
    %999 = vmatprep.subr.bf16.mxu0 %v847
    %1000 = vmatpush2.bf16.msra.mxu0 %v846
    %1001 = vmatprep.mubr.bf16.mxu0 %v967
    %1002 = vmatmul.mubr.bf16.gmra.mxu0 %v460
    %v1003 = vpop.f32.mrf.mxu0
    %v1004 = vadd.f32 0.0, %v1003
    %v1005 = vpop.f32.mrf.mxu0
    %v1006 = vadd.f32 0.0, %v1005
    %v1007 = vpop.f32.mrf.mxu0
    %v1008 = vadd.f32 0.0, %v1007
    %v1009 = vpop.f32.mrf.mxu0
    %v1010 = vadd.f32 0.0, %v1009
    %1011 = vdwg.mxu0
    %1012 = vmatprep.subr.bf16.mxu0 %v843
    %1013 = vmatpush1.bf16.msra.mxu0 %v842
    %1014 = vmatprep.subr.bf16.mxu0 %v837
    %1015 = vmatpush1.bf16.msra.mxu0 %v836
    %1016 = vmatprep.subr.bf16.mxu0 %v831
    %1017 = vmatpush1.bf16.msra.mxu0 %v830
    %1018 = vmatprep.subr.bf16.mxu0 %v825
    %1019 = vmatpush1.bf16.msra.mxu0 %v824
    %1020 = vmatprep.subr.bf16.mxu0 %v819
    %1021 = vmatpush1.bf16.msra.mxu0 %v818
    %1022 = vmatprep.subr.bf16.mxu0 %v813
    %1023 = vmatpush1.bf16.msra.mxu0 %v812
    %1024 = vmatprep.subr.bf16.mxu0 %v807
    %1025 = vmatpush1.bf16.msra.mxu0 %v806
    %1026 = vmatprep.subr.bf16.mxu0 %v801
    %1027 = vmatpush1.bf16.msra.mxu0 %v800
    %1028 = vmatprep.subr.bf16.mxu0 0
    %1029 = vmatpush2.bf16.msra.mxu0 0
    %1030 = vmatprep.subr.bf16.mxu0 0
    %1031 = vmatpush2.bf16.msra.mxu0 0
    %1032 = vmatprep.subr.bf16.mxu0 %v879
    %1033 = vmatpush2.bf16.msra.mxu0 %v878
    %1034 = vmatprep.subr.bf16.mxu0 %v873
    %1035 = vmatpush2.bf16.msra.mxu0 %v872
    %1036 = vmatprep.subr.bf16.mxu0 %v867
    %1037 = vmatpush2.bf16.msra.mxu0 %v866
    %1038 = vmatprep.subr.bf16.mxu0 %v861
    %1039 = vmatpush2.bf16.msra.mxu0 %v860
    %1040 = vmatprep.subr.bf16.mxu0 %v855
    %1041 = vmatpush2.bf16.msra.mxu0 %v854
    %1042 = vmatprep.subr.bf16.mxu0 %v849
    %1043 = vmatpush2.bf16.msra.mxu0 %v848
    %1044 = vmatprep.mubr.bf16.mxu0 %v967
    %1045 = vmatmul.mubr.bf16.gmra.mxu0 %v460
    %v1046 = vpop.f32.mrf.mxu0
    %v1047 = vadd.f32 0.0, %v1046
    %v1048 = vpop.f32.mrf.mxu0
    %v1049 = vadd.f32 0.0, %v1048
    %v1050 = vpop.f32.mrf.mxu0
    %v1051 = vadd.f32 0.0, %v1050
    %v1052 = vpop.f32.mrf.mxu0
    %v1053 = vadd.f32 0.0, %v1052
    %1054 = vdwg.mxu0
    %1055 = vmatprep.subr.bf16.mxu0 %v845
    %1056 = vmatpush1.bf16.msra.mxu0 %v844
    %1057 = vmatprep.subr.bf16.mxu0 %v839
    %1058 = vmatpush1.bf16.msra.mxu0 %v838
    %1059 = vmatprep.subr.bf16.mxu0 %v833
    %1060 = vmatpush1.bf16.msra.mxu0 %v832
    %1061 = vmatprep.subr.bf16.mxu0 %v827
    %1062 = vmatpush1.bf16.msra.mxu0 %v826
    %1063 = vmatprep.subr.bf16.mxu0 %v821
    %1064 = vmatpush1.bf16.msra.mxu0 %v820
    %1065 = vmatprep.subr.bf16.mxu0 %v815
    %1066 = vmatpush1.bf16.msra.mxu0 %v814
    %1067 = vmatprep.subr.bf16.mxu0 %v809
    %1068 = vmatpush1.bf16.msra.mxu0 %v808
    %1069 = vmatprep.subr.bf16.mxu0 %v803
    %1070 = vmatpush1.bf16.msra.mxu0 %v802
    %1071 = vmatprep.subr.bf16.mxu0 0
    %1072 = vmatpush2.bf16.msra.mxu0 0
    %1073 = vmatprep.subr.bf16.mxu0 0
    %1074 = vmatpush2.bf16.msra.mxu0 0
    %1075 = vmatprep.subr.bf16.mxu0 %v881
    %1076 = vmatpush2.bf16.msra.mxu0 %v880
    %1077 = vmatprep.subr.bf16.mxu0 %v875
    %1078 = vmatpush2.bf16.msra.mxu0 %v874
    %1079 = vmatprep.subr.bf16.mxu0 %v869
    %1080 = vmatpush2.bf16.msra.mxu0 %v868
    %1081 = vmatprep.subr.bf16.mxu0 %v863
    %1082 = vmatpush2.bf16.msra.mxu0 %v862
    %1083 = vmatprep.subr.bf16.mxu0 %v857
    %1084 = vmatpush2.bf16.msra.mxu0 %v856
    %1085 = vmatprep.subr.bf16.mxu0 %v851
    %1086 = vmatpush2.bf16.msra.mxu0 %v850
    %1087 = vmatprep.mubr.bf16.mxu0 %v967
    %1088 = vmatmul.mubr.bf16.gmra.mxu0 %v460
    %v1089 = vpop.f32.mrf.mxu0
    %v1090 = vadd.f32 0.0, %v1089
    %v1091 = vpop.f32.mrf.mxu0
    %v1092 = vadd.f32 0.0, %v1091
    %v1093 = vpop.f32.mrf.mxu0
    %v1094 = vadd.f32 0.0, %v1093
    %v1095 = vpop.f32.mrf.mxu0
    %v1096 = vadd.f32 0.0, %v1095
    %1097 = vdwg.mxu0
    %v1098 = vpack.c.bf16 %v1008, %v1004
    %v1099 = vpack.c.bf16 %v1010, %v1006
    %v1100 = vpack.c.bf16 %v1051, %v1047
    %v1101 = vpack.c.bf16 %v1053, %v1049
    %v1102 = vpack.c.bf16 %v1094, %v1090
    %v1103 = vpack.c.bf16 %v1096, %v1092
    %v1104 = vld [vmem:[%s4 + $0xb0] sm:$0xf]
    %v1105 = vld [vmem:[%s4 + $0xb8] sm:$0xf]
    %s1106 = scalar_lea.vmem %s5, 16
    %v1107 = vld [vmem:[%s1106] ss:$8 sm:$0x3]
    %v1109 = vlaneseq
    %v1110 = vshrl.u32 %v1109, 7
    %v1111 = vsub.s32 0, %v1110
    %v1112 = vrot.slane %v1107, %v1111
    %v1113 = vlaneseq
    %v1114 = vshrl.u32 %v1113, 7
    %v1115 = vsub.s32 1, %v1114
    %v1116 = vrot.slane %v1107, %v1115
    %v1121 = vunpack.c.l.b16 %v1104
    %v1122 = vunpack.c.l.b16 %v1105
    %v1123 = vpack.c.b16 %v1122, %v1121
    %vm1124 = vcmask 392192
    %v1126 = vsel %vm1124, %v1123, 0
    %1128 = vmatprep.subr.bf16.mxu0 0
    %1129 = vmatpush1.bf16.msra.mxu0 0
    %1130 = vmatprep.subr.bf16.mxu0 0
    %1131 = vmatpush1.bf16.msra.mxu0 0
    %1132 = vmatprep.subr.bf16.mxu0 0
    %1133 = vmatpush1.bf16.msra.mxu0 0
    %1134 = vmatprep.subr.bf16.mxu0 0
    %1135 = vmatpush1.bf16.msra.mxu0 0
    %1136 = vmatprep.subr.bf16.mxu0 0
    %1137 = vmatpush1.bf16.msra.mxu0 0
    %1138 = vmatprep.subr.bf16.mxu0 %v1103
    %1139 = vmatpush1.bf16.msra.mxu0 %v1102
    %1140 = vmatprep.subr.bf16.mxu0 %v1101
    %1141 = vmatpush1.bf16.msra.mxu0 %v1100
    %1142 = vmatprep.subr.bf16.mxu0 %v1099
    %1143 = vmatpush1.bf16.msra.mxu0 %v1098
    %1144 = vmatprep.subr.bf16.mxu0 0
    %1145 = vmatpush2.bf16.msra.mxu0 0
    %1146 = vmatprep.subr.bf16.mxu0 0
    %1147 = vmatpush2.bf16.msra.mxu0 0
    %1148 = vmatprep.subr.bf16.mxu0 0
    %1149 = vmatpush2.bf16.msra.mxu0 0
    %1150 = vmatprep.subr.bf16.mxu0 0
    %1151 = vmatpush2.bf16.msra.mxu0 0
    %1152 = vmatprep.subr.bf16.mxu0 0
    %1153 = vmatpush2.bf16.msra.mxu0 0
    %1154 = vmatprep.subr.bf16.mxu0 0
    %1155 = vmatpush2.bf16.msra.mxu0 0
    %1156 = vmatprep.subr.bf16.mxu0 0
    %1157 = vmatpush2.bf16.msra.mxu0 0
    %1158 = vmatprep.subr.bf16.mxu0 0
    %1159 = vmatpush2.bf16.msra.mxu0 0
    %1160 = vmatprep.mubr.bf16.mxu0 0
    %1161 = vmatmul.mubr.bf16.gmra.mxu0 %v1126
    %v1162 = vpop.f32.mrf.mxu0
    %v1163 = vadd.f32 %v1112, %v1162
    %v1164 = vpop.f32.mrf.mxu0
    %v1165 = vadd.f32 %v1116, %v1164
    %v1166 = vpop.f32.mrf.mxu0
    %v1167 = vadd.f32 %v1112, %v1166
    %v1168 = vpop.f32.mrf.mxu0
    %v1169 = vadd.f32 %v1116, %v1168
    %1170 = vdwg.mxu0
    %vm1171 = vcmp.gt.f32.partialorder %v1163, 0.0
    %vm1172 = vcmp.gt.f32.partialorder %v1165, 0.0
    %vm1173 = vcmp.gt.f32.partialorder %v1167, 0.0
    %vm1174 = vcmp.gt.f32.partialorder %v1169, 0.0
    %v1175 = vmin.f32 %v1163, 0.0
    %v1176 = vmin.f32 %v1165, 0.0
    %v1177 = vmin.f32 %v1167, 0.0
    %v1178 = vmin.f32 %v1169, 0.0
    %v1179 = vmul.f32 %v1175, 1.442695
    %v1180 = vpow.pop %v1179
    %v1181 = vmul.f32 %v1176, 1.442695
    %v1182 = vpow.pop %v1181
    %v1183 = vmul.f32 %v1177, 1.442695
    %v1184 = vpow.pop %v1183
    %v1185 = vmul.f32 %v1178, 1.442695
    %v1186 = vpow.pop %v1185
    %v1187 = vsub.f32 %v1180, 1.0
    %v1188 = vsub.f32 %v1182, 1.0
    %v1189 = vsub.f32 %v1184, 1.0
    %v1190 = vsub.f32 %v1186, 1.0
    %v1191 = vsel %vm1171, %v1163, %v1187
    %v1192 = vsel %vm1172, %v1165, %v1188
    %v1193 = vsel %vm1173, %v1167, %v1189
    %v1194 = vsel %vm1174, %v1169, %v1190
    %v1195 = vpack.c.bf16 %v1193, %v1191
    %v1196 = vpack.c.bf16 %v1194, %v1192
    %v1197 = vld [vmem:[%s4] sm:$0xff]
    %v1198 = vld [vmem:[%s4 + $0x8] sm:$0xff]
    %v1199 = vld [vmem:[%s4 + $0x10] sm:$0xff]
    %v1200 = vld [vmem:[%s4 + $0x18] sm:$0xff]
    %v1201 = vld [vmem:[%s4 + $0x20] sm:$0xff]
    %v1202 = vld [vmem:[%s4 + $0x28] sm:$0xff]
    %v1203 = vld [vmem:[%s4 + $0x30] sm:$0xff]
    %v1204 = vld [vmem:[%s4 + $0x38] sm:$0xff]
    %v1205 = vld [vmem:[%s4 + $0x40] sm:$0xff]
    %v1206 = vld [vmem:[%s4 + $0x48] sm:$0xff]
    %v1207 = vld [vmem:[%s4 + $0x50] sm:$0xff]
    %v1208 = vld [vmem:[%s4 + $0x58] sm:$0xff]
    %v1209 = vld [vmem:[%s4 + $0x60] sm:$0xff]
    %v1210 = vld [vmem:[%s4 + $0x68] sm:$0xff]
    %v1211 = vld [vmem:[%s4 + $0x70] sm:$0xff]
    %v1212 = vld [vmem:[%s4 + $0x78] sm:$0xff]
    %v1213 = vld [vmem:[%s4 + $0x80] sm:$0xff]
    %v1214 = vld [vmem:[%s4 + $0x88] sm:$0xff]
    %v1215 = vld [vmem:[%s4 + $0x90] sm:$0xff]
    %v1216 = vld [vmem:[%s4 + $0x98] sm:$0xff]
    %v1237 = vunpack.c.l.b16 %v1197
    %v1238 = vunpack.c.h.b16 %v1197
    %v1239 = vunpack.c.l.b16 %v1198
    %v1240 = vunpack.c.h.b16 %v1198
    %v1241 = vunpack.c.l.b16 %v1199
    %v1242 = vunpack.c.h.b16 %v1199
    %v1243 = vunpack.c.l.b16 %v1200
    %v1244 = vunpack.c.h.b16 %v1200
    %v1245 = vunpack.c.l.b16 %v1201
    %v1246 = vunpack.c.h.b16 %v1201
    %v1247 = vunpack.c.l.b16 %v1202
    %v1248 = vunpack.c.h.b16 %v1202
    %v1249 = vunpack.c.l.b16 %v1203
    %v1250 = vunpack.c.h.b16 %v1203
    %v1251 = vunpack.c.l.b16 %v1204
    %v1252 = vunpack.c.h.b16 %v1204
    %v1253 = vunpack.c.l.b16 %v1205
    %v1254 = vunpack.c.h.b16 %v1205
    %v1255 = vunpack.c.l.b16 %v1206
    %v1256 = vunpack.c.h.b16 %v1206
    %v1257 = vunpack.c.l.b16 %v1207
    %v1258 = vunpack.c.h.b16 %v1207
    %v1259 = vunpack.c.l.b16 %v1208
    %v1260 = vunpack.c.h.b16 %v1208
    %v1261 = vunpack.c.l.b16 %v1209
    %v1262 = vunpack.c.h.b16 %v1209
    %v1263 = vunpack.c.l.b16 %v1210
    %v1264 = vunpack.c.h.b16 %v1210
    %v1265 = vunpack.c.l.b16 %v1211
    %v1266 = vunpack.c.h.b16 %v1211
    %v1267 = vunpack.c.l.b16 %v1212
    %v1268 = vunpack.c.h.b16 %v1212
    %v1269 = vunpack.c.l.b16 %v1213
    %v1270 = vunpack.c.h.b16 %v1213
    %v1271 = vunpack.c.l.b16 %v1214
    %v1272 = vunpack.c.h.b16 %v1214
    %v1273 = vunpack.c.l.b16 %v1215
    %v1274 = vunpack.c.h.b16 %v1215
    %v1275 = vunpack.c.l.b16 %v1216
    %v1276 = vunpack.c.h.b16 %v1216
    %v1277 = vpack.c.b16 %v1239, %v1237
    %v1278 = vpack.c.b16 %v1240, %v1238
    %v1279 = vpack.c.b16 %v1243, %v1241
    %v1280 = vpack.c.b16 %v1244, %v1242
    %v1281 = vpack.c.b16 %v1247, %v1245
    %v1282 = vpack.c.b16 %v1248, %v1246
    %v1283 = vpack.c.b16 %v1251, %v1249
    %v1284 = vpack.c.b16 %v1252, %v1250
    %v1285 = vpack.c.b16 %v1255, %v1253
    %v1286 = vpack.c.b16 %v1256, %v1254
    %v1287 = vpack.c.b16 %v1259, %v1257
    %v1288 = vpack.c.b16 %v1260, %v1258
    %v1289 = vpack.c.b16 %v1263, %v1261
    %v1290 = vpack.c.b16 %v1264, %v1262
    %v1291 = vpack.c.b16 %v1267, %v1265
    %v1292 = vpack.c.b16 %v1268, %v1266
    %v1293 = vpack.c.b16 %v1271, %v1269
    %v1294 = vpack.c.b16 %v1272, %v1270
    %v1295 = vpack.c.b16 %v1275, %v1273
    %v1296 = vpack.c.b16 %v1276, %v1274
    %vm1317 = vcmask 261120
    %v1319 = vsel %vm1317, %v1196, 0
    %1321 = vmatprep.subr.bf16.mxu0 %v1292
    %1322 = vmatpush1.bf16.msra.mxu0 %v1291
    %1323 = vmatprep.subr.bf16.mxu0 %v1290
    %1324 = vmatpush1.bf16.msra.mxu0 %v1289
    %1325 = vmatprep.subr.bf16.mxu0 %v1288
    %1326 = vmatpush1.bf16.msra.mxu0 %v1287
    %1327 = vmatprep.subr.bf16.mxu0 %v1286
    %1328 = vmatpush1.bf16.msra.mxu0 %v1285
    %1329 = vmatprep.subr.bf16.mxu0 %v1284
    %1330 = vmatpush1.bf16.msra.mxu0 %v1283
    %1331 = vmatprep.subr.bf16.mxu0 %v1282
    %1332 = vmatpush1.bf16.msra.mxu0 %v1281
    %1333 = vmatprep.subr.bf16.mxu0 %v1280
    %1334 = vmatpush1.bf16.msra.mxu0 %v1279
    %1335 = vmatprep.subr.bf16.mxu0 %v1278
    %1336 = vmatpush1.bf16.msra.mxu0 %v1277
    %1337 = vmatprep.subr.bf16.mxu0 0
    %1338 = vmatpush2.bf16.msra.mxu0 0
    %1339 = vmatprep.subr.bf16.mxu0 0
    %1340 = vmatpush2.bf16.msra.mxu0 0
    %1341 = vmatprep.subr.bf16.mxu0 0
    %1342 = vmatpush2.bf16.msra.mxu0 0
    %1343 = vmatprep.subr.bf16.mxu0 0
    %1344 = vmatpush2.bf16.msra.mxu0 0
    %1345 = vmatprep.subr.bf16.mxu0 0
    %1346 = vmatpush2.bf16.msra.mxu0 0
    %1347 = vmatprep.subr.bf16.mxu0 0
    %1348 = vmatpush2.bf16.msra.mxu0 0
    %1349 = vmatprep.subr.bf16.mxu0 %v1296
    %1350 = vmatpush2.bf16.msra.mxu0 %v1295
    %1351 = vmatprep.subr.bf16.mxu0 %v1294
    %1352 = vmatpush2.bf16.msra.mxu0 %v1293
    %1353 = vmatprep.mubr.bf16.mxu0 %v1319
    %1354 = vmatmul.mubr.bf16.gmra.mxu0 %v1195
    %v1355 = vpop.f32.mrf.mxu0
    %v1356 = vadd.f32 0.0, %v1355
    %v1357 = vpop.f32.mrf.mxu0
    %v1358 = vadd.f32 0.0, %v1357
    %v1359 = vpop.f32.mrf.mxu0
    %v1360 = vadd.f32 0.0, %v1359
    %v1361 = vpop.f32.mrf.mxu0
    %v1362 = vadd.f32 0.0, %v1361
    %1363 = vdwg.mxu0
    %v1364 = vpack.c.bf16 %v1360, %v1356
    %v1365 = vpack.c.bf16 %v1362, %v1358
    %1367 = vrot.lane.b32.xlu0 %v1364, 96
    %v1368 = vpop.permute.xlu0 %1367
    %1370 = vrot.lane.b32.xlu0 %v1364, 64
    %v1371 = vpop.permute.xlu0 %1370
    %1373 = vrot.lane.b32.xlu0 %v1364, 32
    %v1374 = vpop.permute.xlu0 %1373
    %v1376 = vld [vmem:[%s4 + $0xc0] sm:$0x1]
    %v1377 = vld [vmem:[%s4 + $0xd0] sm:$0xf]
    %v1378 = vld [vmem:[%s1] sm:$0x3]
    %v1379 = vpack.c.bf16 %v1378, %v1378
    %vm1380 = vcmask 64512
    %v1382 = vsel %vm1380, %v1379, 0
    %vm1384 = vcmask 1043456
    %v1386 = vsel %vm1384, %v1377, 0
    %1388 = vmatprep.subr.bf16.mxu0 0
    %1389 = vmatpush1.bf16.msra.mxu0 0
    %1390 = vmatprep.subr.bf16.mxu0 0
    %1391 = vmatpush1.bf16.msra.mxu0 0
    %1392 = vmatprep.subr.bf16.mxu0 0
    %1393 = vmatpush1.bf16.msra.mxu0 0
    %1394 = vmatprep.subr.bf16.mxu0 0
    %1395 = vmatpush1.bf16.msra.mxu0 0
    %1396 = vmatprep.subr.bf16.mxu0 0
    %1397 = vmatpush1.bf16.msra.mxu0 0
    %1398 = vmatprep.subr.bf16.mxu0 0
    %1399 = vmatpush1.bf16.msra.mxu0 0
    %1400 = vmatprep.subr.bf16.mxu0 0
    %1401 = vmatpush1.bf16.msra.mxu0 0
    %1402 = vmatprep.subr.bf16.mxu0 0
    %1403 = vmatpush1.bf16.msra.mxu0 %v1386
    %1404 = vmatprep.subr.bf16.mxu0 0
    %1405 = vmatpush2.bf16.msra.mxu0 0
    %1406 = vmatprep.subr.bf16.mxu0 0
    %1407 = vmatpush2.bf16.msra.mxu0 0
    %1408 = vmatprep.subr.bf16.mxu0 0
    %1409 = vmatpush2.bf16.msra.mxu0 0
    %1410 = vmatprep.subr.bf16.mxu0 0
    %1411 = vmatpush2.bf16.msra.mxu0 0
    %1412 = vmatprep.subr.bf16.mxu0 0
    %1413 = vmatpush2.bf16.msra.mxu0 0
    %1414 = vmatprep.subr.bf16.mxu0 0
    %1415 = vmatpush2.bf16.msra.mxu0 0
    %1416 = vmatprep.subr.bf16.mxu0 0
    %1417 = vmatpush2.bf16.msra.mxu0 0
    %1418 = vmatprep.subr.bf16.mxu0 0
    %1419 = vmatpush2.bf16.msra.mxu0 0
    %1420 = vmatprep.mubr.bf16.mxu0 0
    %1421 = vmatmul.mubr.bf16.gmra.mxu0 %v1382
    %v1422 = vpop.f32.mrf.mxu0
    %v1423 = vadd.f32 0.0, %v1422
    %v1424 = vpop.f32.mrf.mxu0
    %v1425 = vpop.f32.mrf.mxu0
    %v1426 = vpop.f32.mrf.mxu0
    %1427 = vdwg.mxu0
    %vm1428 = vcmask 654336
    %v1430 = vsel %vm1428, %v1376, 0
    %1432 = vmatprep.subr.bf16.mxu0 0
    %1433 = vmatpush1.bf16.msra.mxu0 0
    %1434 = vmatprep.subr.bf16.mxu0 0
    %1435 = vmatpush1.bf16.msra.mxu0 0
    %1436 = vmatprep.subr.bf16.mxu0 0
    %1437 = vmatpush1.bf16.msra.mxu0 0
    %1438 = vmatprep.subr.bf16.mxu0 0
    %1439 = vmatpush1.bf16.msra.mxu0 %v1365
    %1440 = vmatprep.subr.bf16.mxu0 0
    %1441 = vmatpush1.bf16.msra.mxu0 %v1374
    %1442 = vmatprep.subr.bf16.mxu0 0
    %1443 = vmatpush1.bf16.msra.mxu0 %v1371
    %1444 = vmatprep.subr.bf16.mxu0 0
    %1445 = vmatpush1.bf16.msra.mxu0 %v1368
    %1446 = vmatprep.subr.bf16.mxu0 0
    %1447 = vmatpush1.bf16.msra.mxu0 %v1364
    %1448 = vmatprep.subr.bf16.mxu0 0
    %1449 = vmatpush2.bf16.msra.mxu0 0
    %1450 = vmatprep.subr.bf16.mxu0 0
    %1451 = vmatpush2.bf16.msra.mxu0 0
    %1452 = vmatprep.subr.bf16.mxu0 0
    %1453 = vmatpush2.bf16.msra.mxu0 0
    %1454 = vmatprep.subr.bf16.mxu0 0
    %1455 = vmatpush2.bf16.msra.mxu0 0
    %1456 = vmatprep.subr.bf16.mxu0 0
    %1457 = vmatpush2.bf16.msra.mxu0 0
    %1458 = vmatprep.subr.bf16.mxu0 0
    %1459 = vmatpush2.bf16.msra.mxu0 0
    %1460 = vmatprep.subr.bf16.mxu0 0
    %1461 = vmatpush2.bf16.msra.mxu0 0
    %1462 = vmatprep.subr.bf16.mxu0 0
    %1463 = vmatpush2.bf16.msra.mxu0 0
    %1464 = vmatprep.mubr.bf16.mxu0 0
    %1465 = vmatmul.mubr.bf16.gmra.mxu0 %v1430
    %v1466 = vpop.f32.mrf.mxu0
    %v1467 = vadd.f32 %v1423, %v1466
    %v1468 = vpop.f32.mrf.mxu0
    %v1469 = vpop.f32.mrf.mxu0
    %v1470 = vpop.f32.mrf.mxu0
    %1471 = vdwg.mxu0
    %v1472 = vld [vmem:[%s5 + $0x20] ss:$0 sm:$0xff]
    %v1473 = vadd.f32 %v1467, %v1472
    %v1474 = vmax.f32 %v1473, 0.0
    %v1475 = vld [vmem:[%s2] sm:$0x3]
    %v1476 = vld [vmem:[%s4 + $0xe0] sm:$0xf]
    %v1477 = vld [vmem:[%s4 + $0xe8] sm:$0xf]
    %v1478 = vld [vmem:[%s4 + $0xf0] sm:$0xf]
    %v1479 = vld [vmem:[%s4 + $0xf8] sm:$0xf]
    %v1480 = vld [vmem:[%s4 + $0x100] sm:$0xf]
    %v1481 = vld [vmem:[%s4 + $0x108] sm:$0xf]
    %v1482 = vld [vmem:[%s4 + $0x110] sm:$0xf]
    %v1483 = vld [vmem:[%s4 + $0x118] sm:$0xf]
    %v1484 = vpack.c.bf16 %v1474, %v1474
    %v1485 = vld [vmem:[%s5 + $0x30] ss:$0 sm:$0xff]
    %v1490 = vunpack.c.l.b16 %v1476
    %v1491 = vunpack.c.l.b16 %v1477
    %v1492 = vunpack.c.l.b16 %v1478
    %v1493 = vunpack.c.l.b16 %v1479
    %v1494 = vpack.c.b16 %v1491, %v1490
    %v1495 = vpack.c.b16 %v1493, %v1492
    %v1499 = vsel %vm1317, %v1484, 0
    %1501 = vmatprep.subr.bf16.mxu0 0
    %1502 = vmatpush1.bf16.msra.mxu0 0
    %1503 = vmatprep.subr.bf16.mxu0 0
    %1504 = vmatpush1.bf16.msra.mxu0 0
    %1505 = vmatprep.subr.bf16.mxu0 0
    %1506 = vmatpush1.bf16.msra.mxu0 0
    %1507 = vmatprep.subr.bf16.mxu0 0
    %1508 = vmatpush1.bf16.msra.mxu0 0
    %1509 = vmatprep.subr.bf16.mxu0 0
    %1510 = vmatpush1.bf16.msra.mxu0 0
    %1511 = vmatprep.subr.bf16.mxu0 0
    %1512 = vmatpush1.bf16.msra.mxu0 0
    %1513 = vmatprep.subr.bf16.mxu0 0
    %1514 = vmatpush1.bf16.msra.mxu0 %v1495
    %1515 = vmatprep.subr.bf16.mxu0 0
    %1516 = vmatpush1.bf16.msra.mxu0 %v1494
    %1517 = vmatprep.subr.bf16.mxu0 0
    %1518 = vmatpush2.bf16.msra.mxu0 0
    %1519 = vmatprep.subr.bf16.mxu0 0
    %1520 = vmatpush2.bf16.msra.mxu0 0
    %1521 = vmatprep.subr.bf16.mxu0 0
    %1522 = vmatpush2.bf16.msra.mxu0 0
    %1523 = vmatprep.subr.bf16.mxu0 0
    %1524 = vmatpush2.bf16.msra.mxu0 0
    %1525 = vmatprep.subr.bf16.mxu0 0
    %1526 = vmatpush2.bf16.msra.mxu0 0
    %1527 = vmatprep.subr.bf16.mxu0 0
    %1528 = vmatpush2.bf16.msra.mxu0 0
    %1529 = vmatprep.subr.bf16.mxu0 0
    %1530 = vmatpush2.bf16.msra.mxu0 0
    %1531 = vmatprep.subr.bf16.mxu0 0
    %1532 = vmatpush2.bf16.msra.mxu0 0
    %1533 = vmatprep.mubr.bf16.mxu0 0
    %1534 = vmatmul.mubr.bf16.gmra.mxu0 %v1499
    %v1535 = vpop.f32.mrf.mxu0
    %v1536 = vadd.f32 %v1485, %v1535
    %v1537 = vpop.f32.mrf.mxu0
    %v1538 = vpop.f32.mrf.mxu0
    %v1539 = vpop.f32.mrf.mxu0
    %1540 = vdwg.mxu0
    %v1541 = vpack.c.bf16 %v1475, %v1475
    %v1542 = vld [vmem:[%s5 + $0x40] ss:$0 sm:$0xff]
    %v1547 = vunpack.c.l.b16 %v1480
    %v1548 = vunpack.c.l.b16 %v1481
    %v1549 = vunpack.c.l.b16 %v1482
    %v1550 = vunpack.c.l.b16 %v1483
    %v1551 = vpack.c.b16 %v1548, %v1547
    %v1552 = vpack.c.b16 %v1550, %v1549
    %v1556 = vsel %vm1317, %v1541, 0
    %1558 = vmatprep.subr.bf16.mxu0 0
    %1559 = vmatpush1.bf16.msra.mxu0 0
    %1560 = vmatprep.subr.bf16.mxu0 0
    %1561 = vmatpush1.bf16.msra.mxu0 0
    %1562 = vmatprep.subr.bf16.mxu0 0
    %1563 = vmatpush1.bf16.msra.mxu0 0
    %1564 = vmatprep.subr.bf16.mxu0 0
    %1565 = vmatpush1.bf16.msra.mxu0 0
    %1566 = vmatprep.subr.bf16.mxu0 0
    %1567 = vmatpush1.bf16.msra.mxu0 0
    %1568 = vmatprep.subr.bf16.mxu0 0
    %1569 = vmatpush1.bf16.msra.mxu0 0
    %1570 = vmatprep.subr.bf16.mxu0 0
    %1571 = vmatpush1.bf16.msra.mxu0 %v1552
    %1572 = vmatprep.subr.bf16.mxu0 0
    %1573 = vmatpush1.bf16.msra.mxu0 %v1551
    %1574 = vmatprep.subr.bf16.mxu0 0
    %1575 = vmatpush2.bf16.msra.mxu0 0
    %1576 = vmatprep.subr.bf16.mxu0 0
    %1577 = vmatpush2.bf16.msra.mxu0 0
    %1578 = vmatprep.subr.bf16.mxu0 0
    %1579 = vmatpush2.bf16.msra.mxu0 0
    %1580 = vmatprep.subr.bf16.mxu0 0
    %1581 = vmatpush2.bf16.msra.mxu0 0
    %1582 = vmatprep.subr.bf16.mxu0 0
    %1583 = vmatpush2.bf16.msra.mxu0 0
    %1584 = vmatprep.subr.bf16.mxu0 0
    %1585 = vmatpush2.bf16.msra.mxu0 0
    %1586 = vmatprep.subr.bf16.mxu0 0
    %1587 = vmatpush2.bf16.msra.mxu0 0
    %1588 = vmatprep.subr.bf16.mxu0 0
    %1589 = vmatpush2.bf16.msra.mxu0 0
    %1590 = vmatprep.mubr.bf16.mxu0 0
    %1591 = vmatmul.mubr.bf16.gmra.mxu0 %v1556
    %v1592 = vpop.f32.mrf.mxu0
    %v1593 = vadd.f32 %v1542, %v1592
    %v1594 = vpop.f32.mrf.mxu0
    %v1595 = vpop.f32.mrf.mxu0
    %v1596 = vpop.f32.mrf.mxu0
    %1597 = vdwg.mxu0
    %v1598 = vadd.f32 %v1536, %v1593
    %v1599 = vxor.u32 %v1598, 2147483648
    %v1600 = vmul.f32 %v1599, 1.442695
    %v1601 = vpow.pop %v1600
    %v1602 = vadd.f32 %v1601, 1.0
    %v1603 = vrcp.pop %v1602
    %v1604 = vmul.f32 1.0, %v1603
    %1606 = vrot.lane.b32.xlu0 %v1593, 64
    %v1607 = vpop.permute.xlu0 %1606
    %v1609 = vmul.f32 %v1604, %v1607
    %1611 = vrot.lane.b32.xlu0 %v1609, 64
    %v1612 = vpop.permute.xlu0 %1611
    %v1614 = vadd.f32 %v1536, %v1612
    %v1615 = vtanh.pop %v1614
    %v1616 = vsub.f32 1.0, %v1604
    %1618 = vrot.lane.b32.xlu0 %v1615, 96
    %v1619 = vpop.permute.xlu0 %1618
    %v1621 = vmul.f32 %v1616, %v1619
    %1623 = vrot.lane.b32.xlu0 %v1475, 32
    %v1624 = vpop.permute.xlu0 %1623
    %v1626 = vmul.f32 %v1604, %v1624
    %v1627 = vadd.f32 %v1621, %v1626
    %v1628 = vld [vmem:[%s4 + $0x120] sm:$0xf]
    %v1629 = vld [vmem:[%s4 + $0x128] sm:$0xf]
    %v1630 = vld [vmem:[%s4 + $0x130] sm:$0xf]
    %v1631 = vld [vmem:[%s4 + $0x138] sm:$0xf]
    %v1632 = vpack.c.bf16 %v1627, %v1627
    %v1633 = vld [vmem:[%s5 + $0x50] ss:$0 sm:$0xff]
    %1635 = vrot.lane.b32.xlu0 %v1632, 96
    %v1636 = vpop.permute.xlu0 %1635
    %v1641 = vunpack.c.l.b16 %v1628
    %v1642 = vunpack.c.l.b16 %v1629
    %v1643 = vunpack.c.l.b16 %v1630
    %v1644 = vunpack.c.l.b16 %v1631
    %v1645 = vpack.c.b16 %v1642, %v1641
    %v1646 = vpack.c.b16 %v1644, %v1643
    %v1650 = vsel %vm1317, %v1636, 0
    %1652 = vmatprep.subr.bf16.mxu0 0
    %1653 = vmatpush1.bf16.msra.mxu0 0
    %1654 = vmatprep.subr.bf16.mxu0 0
    %1655 = vmatpush1.bf16.msra.mxu0 0
    %1656 = vmatprep.subr.bf16.mxu0 0
    %1657 = vmatpush1.bf16.msra.mxu0 0
    %1658 = vmatprep.subr.bf16.mxu0 0
    %1659 = vmatpush1.bf16.msra.mxu0 0
    %1660 = vmatprep.subr.bf16.mxu0 0
    %1661 = vmatpush1.bf16.msra.mxu0 0
    %1662 = vmatprep.subr.bf16.mxu0 0
    %1663 = vmatpush1.bf16.msra.mxu0 0
    %1664 = vmatprep.subr.bf16.mxu0 0
    %1665 = vmatpush1.bf16.msra.mxu0 %v1646
    %1666 = vmatprep.subr.bf16.mxu0 0
    %1667 = vmatpush1.bf16.msra.mxu0 %v1645
    %1668 = vmatprep.subr.bf16.mxu0 0
    %1669 = vmatpush2.bf16.msra.mxu0 0
    %1670 = vmatprep.subr.bf16.mxu0 0
    %1671 = vmatpush2.bf16.msra.mxu0 0
    %1672 = vmatprep.subr.bf16.mxu0 0
    %1673 = vmatpush2.bf16.msra.mxu0 0
    %1674 = vmatprep.subr.bf16.mxu0 0
    %1675 = vmatpush2.bf16.msra.mxu0 0
    %1676 = vmatprep.subr.bf16.mxu0 0
    %1677 = vmatpush2.bf16.msra.mxu0 0
    %1678 = vmatprep.subr.bf16.mxu0 0
    %1679 = vmatpush2.bf16.msra.mxu0 0
    %1680 = vmatprep.subr.bf16.mxu0 0
    %1681 = vmatpush2.bf16.msra.mxu0 0
    %1682 = vmatprep.subr.bf16.mxu0 0
    %1683 = vmatpush2.bf16.msra.mxu0 0
    %1684 = vmatprep.mubr.bf16.mxu0 0
    %1685 = vmatmul.mubr.bf16.gmra.mxu0 %v1650
    %v1686 = vpop.f32.mrf.mxu0
    %v1687 = vadd.f32 %v1633, %v1686
    %v1688 = vpop.f32.mrf.mxu0
    %v1689 = vpop.f32.mrf.mxu0
    %v1690 = vpop.f32.mrf.mxu0
    %1691 = vdwg.mxu0
    %vm1692 = vcmask 41984
    %1693 = vst.msk [vmem:[#allocation5] sm:$0x3] %vm1692, %v1687
    %1695 = vrot.lane.b32.xlu0 %v1627, 96
    %v1696 = vpop.permute.xlu0 %1695
    %vm1698 = vcmask 254976
    %1699 = vst.msk [vmem:[#allocation6] sm:$0x3] %vm1698, %v1696
    // Predicated region
    $region30: #{forward.1} parent=1 // pred_check
      _
    $region31: #{forward.1} parent=1 // pred_check_branch
      %1701 = sbr.rel (0) target = $region33
    $region32: #{forward.1} parent=1 // pred_region
      %s1703 = ssub.s32 32, 32
      %1704 = vsyncadd [#allocation4], %s1703
      %s1706 = sshll.u32 [#allocation5], 4
      %s1707 = int_to_ptr.vmem [resolvable:$true] %s1706
      %1709 = dma.vmem_to_hbm [thread:$0]  %s1707, 32, %s6, [#allocation4]
    $region33: #{forward.1} parent=1 // pred_fallthru
      _
    // Predicated region
    $region34: #{forward.1} parent=1 // pred_check
      _
    $region35: #{forward.1} parent=1 // pred_check_branch
      %1711 = sbr.rel (0) target = $region37
    $region36: #{forward.1} parent=1 // pred_region
      %s1713 = ssub.s32 32, 32
      %1714 = vsyncadd [#allocation7], %s1713
      %s1716 = sshll.u32 [#allocation6], 4
      %s1717 = int_to_ptr.vmem [resolvable:$true] %s1716
      %1719 = dma.vmem_to_hbm [thread:$0]  %s1717, 32, %s7, [#allocation7]
    $region37: #{forward.1} parent=1 // pred_fallthru
      _
    // Predicated region
    $region38: #{forward.1} parent=1 // pred_check
      _
    $region39: #{forward.1} parent=1 // pred_check_branch
      %1721 = sbr.rel (0) target = $region41
    $region40: #{forward.1} parent=1 // pred_region
      %1722 = dma.done [#allocation4], 32
    $region41: #{forward.1} parent=1 // pred_fallthru
      _
    // Predicated region
    $region42: #{forward.1} parent=1 // pred_check
      _
    $region43: #{forward.1} parent=1 // pred_check_branch
      %1724 = sbr.rel (0) target = $region45
    $region44: #{forward.1} parent=1 // pred_region
      %1725 = dma.done [#allocation7], 32
    $region45: #{forward.1} parent=1 // pred_fallthru
      _
    %1726 = vsyncpa [#allocation3], 1
    %1727 = vsyncpa [#allocation4], 1
    %1728 = vsyncpa [#allocation7], 1

</llo_original>
